<compile_context>
chip_gen: v7x
topology: tpu7x:2x2x1
jax: 0.10.0
libtpu: 0.0.40
codegen_flags: <defaults>
</compile_context>

<pallas_src>
import jax
import jax.numpy as jnp
from jax import lax
from jax.experimental import pallas as pl
from jax.experimental.pallas import tpu as pltpu

N_BATCH = 2
IN_H = IN_W = 28
C1_OUT, C2_OUT = 6, 16
K = 5
W1O = IN_W - K + 1          # 24  conv1 output width
W1P = W1O // 2              # 12  width after pool1
W2O = W1P - K + 1           # 8   conv2 output width
W2P = W2O // 2              # 4   width after pool2
FC1_IN, FC1_OUT, FC2_OUT = C2_OUT * W2P * W2P, 120, 10   # 256, 120, 10

H_BLK = 32                  # per-image padded row block at the conv1 stage

L1 = C1_OUT * W1O           # 144 conv1 output lanes (c*24 + w)
L1P = L1 // 2               # 72
L2 = C2_OUT * W2O           # 128 conv2 output lanes (c*8 + w)

# Row offsets inside the packed weight/bias buffer (all block starts 8-aligned).
_W1_R0, _W1_ROWS = 0, K * IN_W            # (140, 144) conv1 banded weight
_W2_R0, _W2_ROWS = 144, K * C1_OUT * W1P  # (360, 128) conv2 banded weight
_F1_R0, _F1_ROWS = 504, FC1_IN            # (256, 120) fc1 weight
_F2_R0, _F2_ROWS = 760, FC1_OUT           # (120, 10)  fc2 weight
_B_R0 = 880                               # 4 bias rows
_WB_ROWS, _WB_LANES = 884, 144


def _maxpool_2x2(a):
    """2x2 / stride-2 max pool of a (rows, lanes) slab.

    Implemented with even/odd selection matmuls (MXU) + jnp.maximum so that no
    strided slices or layout-changing reshapes are needed."""
    f32 = jnp.float32
    r, l = a.shape
    ri = lax.broadcasted_iota(jnp.int32, (r // 2, r), 0)
    rj = lax.broadcasted_iota(jnp.int32, (r // 2, r), 1)
    s_even = (rj == 2 * ri).astype(f32)
    s_odd = (rj == 2 * ri + 1).astype(f32)
    hr = jnp.maximum(jnp.dot(s_even, a, preferred_element_type=f32),
                     jnp.dot(s_odd, a, preferred_element_type=f32))
    ci = lax.broadcasted_iota(jnp.int32, (l, l // 2), 0)
    cj = lax.broadcasted_iota(jnp.int32, (l, l // 2), 1)
    t_even = (ci == 2 * cj).astype(f32)
    t_odd = (ci == 2 * cj + 1).astype(f32)
    return jnp.maximum(jnp.dot(hr, t_even, preferred_element_type=f32),
                       jnp.dot(hr, t_odd, preferred_element_type=f32))


def net_cnn_kernel(x_ref, wb_ref, out_ref):
    f32 = jnp.float32
    n = out_ref.shape[0]
    rows1 = H_BLK * n            # conv1-stage rows (n * 32)
    rows2 = (H_BLK // 2) * n     # conv2-stage rows (n * 16)

    # ---- conv1 (1->6, 5x5 valid) + ReLU : one banded MXU matmul --------------
    # xcat rows = n*32 + h_out, lanes = kh*28 + w_in
    xcat = jnp.concatenate(
        [x_ref[kh:kh + rows1, :] for kh in range(K)], axis=1)          # (64, 140)
    w1 = wb_ref[_W1_R0:_W1_R0 + _W1_ROWS, :]                           # (140, 144)
    b1 = wb_ref[_B_R0:_B_R0 + 1, :]                                    # (1, 144)
    c1 = jnp.maximum(jnp.dot(xcat, w1, preferred_element_type=f32) + b1,
                     0.0)                                              # (64, 144)

    # maxpool 2x2 (the extra post-pool ReLU of the PyTorch code is a no-op)
    p1 = _maxpool_2x2(c1)                                              # (32, 72)

    # ---- conv2 (6->16, 5x5 valid) + ReLU : one banded MXU matmul -------------
    # TODO(synk): nn.Dropout2d is identity here (inference mode only).
    p1p = jnp.concatenate([p1, jnp.zeros((8, p1.shape[1]), f32)], axis=0)
    x2 = jnp.concatenate(
        [p1p[kh:kh + rows2, :] for kh in range(K)], axis=1)            # (32, 360)
    w2 = wb_ref[_W2_R0:_W2_R0 + _W2_ROWS, 0:L2]                        # (360, 128)
    b2 = wb_ref[_B_R0 + 1:_B_R0 + 2, 0:L2]                             # (1, 128)
    c2 = jnp.maximum(jnp.dot(x2, w2, preferred_element_type=f32) + b2,
                     0.0)                                              # (32, 128)

    p2 = _maxpool_2x2(c2)                                              # (16, 64)

    # ---- flatten -> (n, 256): lanes ordered hp*64 + c_out*4 + wp -------------
    # Row -> lane move is done with 4 tiny row-selection matmuls + lane concat.
    rows_p2 = p2.shape[0]                                              # 8n
    pieces = []
    for hp in range(W2P):
        ri = lax.broadcasted_iota(jnp.int32, (n, rows_p2), 0)
        ci = lax.broadcasted_iota(jnp.int32, (n, rows_p2), 1)
        sel = (ci == 2 * W2P * ri + hp).astype(f32)                    # (n, 8n)
        pieces.append(jnp.dot(sel, p2, preferred_element_type=f32))    # (n, 64)
    feat = jnp.concatenate(pieces, axis=1)                             # (n, 256)

    # ---- fc1 + ReLU (single dot) ---------------------------------------------
    wf1 = wb_ref[_F1_R0:_F1_R0 + _F1_ROWS, 0:FC1_OUT]                  # (256, 120)
    bf1 = wb_ref[_B_R0 + 2:_B_R0 + 3, 0:FC1_OUT]                       # (1, 120)
    h = jnp.maximum(jnp.dot(feat, wf1, preferred_element_type=f32) + bf1,
                    0.0)                                               # (n, 120)

    # TODO(synk): F.dropout is identity here (inference mode only).

    # ---- fc2 (single dot) ----------------------------------------------------
    wf2 = wb_ref[_F2_R0:_F2_R0 + _F2_ROWS, 0:FC2_OUT]                  # (120, 10)
    bf2 = wb_ref[_B_R0 + 3:_B_R0 + 4, 0:FC2_OUT]                       # (1, 10)
    out_ref[...] = jnp.dot(h, wf2, preferred_element_type=f32) + bf2


# --------------------------- wrapper-side plumbing ---------------------------

def _conv1_band_weight(conv1_w):
    """(140, 144): row = kh*28 + w_in, col = c_out*24 + w_out (banded over kw)."""
    w1k = jnp.transpose(conv1_w[:, 0], (1, 2, 0))                 # (kh, kw, c_out)
    w_in = jnp.arange(IN_W)[:, None]
    w_out = jnp.arange(W1O)[None, :]
    kw = w_in - w_out
    valid = (kw >= 0) & (kw < K)
    band = jnp.where(valid[None, :, :, None],
                     w1k[:, jnp.clip(kw, 0, K - 1), :], 0.0)      # (5,28,24,6)
    return jnp.transpose(band, (0, 1, 3, 2)).reshape(K * IN_W, C1_OUT * W1O)


def _conv2_band_weight(conv2_w):
    """(360, 128): row = kh*72 + c_in*12 + w_in, col = c_out*8 + w_out."""
    w2k = jnp.transpose(conv2_w, (2, 1, 3, 0))                    # (kh, ci, kw, co)
    w_in = jnp.arange(W1P)[:, None]
    w_out = jnp.arange(W2O)[None, :]
    kw = w_in - w_out
    valid = (kw >= 0) & (kw < K)
    band = jnp.where(valid[None, None, :, :, None],
                     w2k[:, :, jnp.clip(kw, 0, K - 1), :], 0.0)   # (5,6,12,8,16)
    return jnp.transpose(band, (0, 1, 2, 4, 3)).reshape(K * C1_OUT * W1P,
                                                        C2_OUT * W2O)


def _pack_weights(params):
    w1b = _conv1_band_weight(params["conv1_w"])                   # (140, 144)
    w2b = _conv2_band_weight(params["conv2_w"])                   # (360, 128)
    # fc1 weight rows reordered to the kernel's flatten order hp*64 + co*4 + wp.
    wf1 = jnp.transpose(params["fc1_w"].reshape(FC1_OUT, C2_OUT, W2P, W2P),
                        (2, 1, 3, 0)).reshape(FC1_IN, FC1_OUT)    # (256, 120)
    wf2 = params["fc2_w"].T                                       # (120, 10)

    brows = jnp.zeros((4, _WB_LANES), jnp.float32)
    brows = brows.at[0, :L1].set(jnp.repeat(params["conv1_b"], W1O))
    brows = brows.at[1, :L2].set(jnp.repeat(params["conv2_b"], W2O))
    brows = brows.at[2, :FC1_OUT].set(params["fc1_b"])
    brows = brows.at[3, :FC2_OUT].set(params["fc2_b"])

    def blk(a, rows):
        return jnp.pad(a, ((0, rows - a.shape[0]), (0, _WB_LANES - a.shape[1])))

    wb = jnp.concatenate([
        blk(w1b, _W2_R0),                  # rows   0..143
        blk(w2b, _W2_ROWS),                # rows 144..503
        blk(wf1, _F1_ROWS),                # rows 504..759
        blk(wf2, _F2_ROWS),                # rows 760..879
        brows,                             # rows 880..883
    ], axis=0).astype(jnp.float32)
    assert wb.shape == (_WB_ROWS, _WB_LANES)
    return wb


def init_params(key):
    ks = jax.random.split(key, 8)

    def u(k, shape, fan_in):
        bound = float(fan_in) ** -0.5
        return jax.random.uniform(k, shape, jnp.float32, -bound, bound)

    return {
        "conv1_w": u(ks[0], (C1_OUT, 1, K, K), 1 * K * K),
        "conv1_b": u(ks[1], (C1_OUT,), 1 * K * K),
        "conv2_w": u(ks[2], (C2_OUT, C1_OUT, K, K), C1_OUT * K * K),
        "conv2_b": u(ks[3], (C2_OUT,), C1_OUT * K * K),
        "fc1_w": u(ks[4], (FC1_OUT, FC1_IN), FC1_IN),
        "fc1_b": u(ks[5], (FC1_OUT,), FC1_IN),
        "fc2_w": u(ks[6], (FC2_OUT, FC1_OUT), FC1_OUT),
        "fc2_b": u(ks[7], (FC2_OUT,), FC1_OUT),
    }


def net_cnn_forward(x_nchw, params):
    n = x_nchw.shape[0]
    # NCHW -> batch-major row slab: row = n*32 + h (zero-padded), lanes = w.
    ximg = x_nchw[:, 0, :, :].astype(jnp.float32)                 # (n, 28, 28)
    xp = jnp.pad(ximg, ((0, 0), (0, H_BLK - IN_H), (0, 0)))       # (n, 32, 28)
    xp = xp.reshape(n * H_BLK, IN_W)
    xp = jnp.pad(xp, ((0, 8), (0, 0)))                            # (n*32+8, 28)

    wb = _pack_weights(params)                                    # (884, 144)

    vmem = pl.BlockSpec(memory_space=pltpu.MemorySpace.VMEM)
    return pl.pallas_call(
        net_cnn_kernel,
        out_shape=jax.ShapeDtypeStruct((n, FC2_OUT), jnp.float32),
        in_specs=[vmem, vmem],
        out_specs=vmem,
    )(xp, wb)


def reference_forward(x, p):
    """Pure-JAX reference of the PyTorch forward (eval mode)."""
    dn = ("NCHW", "OIHW", "NCHW")
    a = lax.conv_general_dilated(x, p["conv1_w"], (1, 1), "VALID", dimension_numbers=dn)
    a = jnp.maximum(a + p["conv1_b"][None, :, None, None], 0.0)
    a = lax.reduce_window(a, -jnp.inf, lax.max, (1, 1, 2, 2), (1, 1, 2, 2), "VALID")
    a = jnp.maximum(a, 0.0)
    a = lax.conv_general_dilated(a, p["conv2_w"], (1, 1), "VALID", dimension_numbers=dn)
    a = jnp.maximum(a + p["conv2_b"][None, :, None, None], 0.0)
    a = lax.reduce_window(a, -jnp.inf, lax.max, (1, 1, 2, 2), (1, 1, 2, 2), "VALID")
    a = jnp.maximum(a, 0.0)
    a = a.reshape(a.shape[0], -1)
    a = jnp.maximum(a @ p["fc1_w"].T + p["fc1_b"], 0.0)
    return a @ p["fc2_w"].T + p["fc2_b"]


if __name__ == "__main__":
    key = jax.random.PRNGKey(0)
    pkey, xkey = jax.random.split(key)
    params = init_params(pkey)
    x = jax.random.normal(xkey, (N_BATCH, 1, IN_H, IN_W), jnp.float32)

    out = jax.block_until_ready(net_cnn_forward(x, params))
    ref = reference_forward(x, params)

    assert out.shape == (N_BATCH, FC2_OUT), out.shape
    if not jnp.allclose(out, ref, atol=5e-3, rtol=5e-3):
        raise AssertionError(
            f"kernel/reference mismatch, max abs err = {float(jnp.max(jnp.abs(out - ref)))}")
    print("KERNEL_OK")
</pallas_src>

<mosaic_0001>
module attributes {stable_mosaic.version = 11 : i64} {
  func.func @net_cnn_kernel(%arg0: memref<72x28xf32, #tpu.memory_space<vmem>>, %arg1: memref<884x144xf32, #tpu.memory_space<vmem>>, %arg2: memref<2x10xf32, #tpu.memory_space<vmem>>) attributes {dimension_semantics = [], scalar_prefetch = 0 : i64, scratch_operands = 0 : i64, tpu.core_type = #tpu.core_type<tc>} {
    %c0 = arith.constant 0 : index
    %c0_0 = arith.constant 0 : index
    %0 = vector.load %arg0[%c0, %c0_0] : memref<72x28xf32, #tpu.memory_space<vmem>>, vector<64x28xf32>
    %c1 = arith.constant 1 : index
    %c0_1 = arith.constant 0 : index
    %1 = vector.load %arg0[%c1, %c0_1] : memref<72x28xf32, #tpu.memory_space<vmem>>, vector<64x28xf32>
    %c2 = arith.constant 2 : index
    %c0_2 = arith.constant 0 : index
    %2 = vector.load %arg0[%c2, %c0_2] : memref<72x28xf32, #tpu.memory_space<vmem>>, vector<64x28xf32>
    %c3 = arith.constant 3 : index
    %c0_3 = arith.constant 0 : index
    %3 = vector.load %arg0[%c3, %c0_3] : memref<72x28xf32, #tpu.memory_space<vmem>>, vector<64x28xf32>
    %c4 = arith.constant 4 : index
    %c0_4 = arith.constant 0 : index
    %4 = vector.load %arg0[%c4, %c0_4] : memref<72x28xf32, #tpu.memory_space<vmem>>, vector<64x28xf32>
    %5 = tpu.concatenate %0, %1, %2, %3, %4 in 1 : vector<64x28xf32>, vector<64x28xf32>, vector<64x28xf32>, vector<64x28xf32>, vector<64x28xf32> -> vector<64x140xf32>
    %c0_5 = arith.constant 0 : index
    %c0_6 = arith.constant 0 : index
    %6 = vector.load %arg1[%c0_5, %c0_6] : memref<884x144xf32, #tpu.memory_space<vmem>>, vector<140x144xf32>
    %c880 = arith.constant 880 : index
    %c0_7 = arith.constant 0 : index
    %7 = vector.load %arg1[%c880, %c0_7] : memref<884x144xf32, #tpu.memory_space<vmem>>, vector<1x144xf32>
    %cst = arith.constant dense<0.000000e+00> : vector<64x144xf32>
    %8 = tpu.matmul %5, %6, %cst {dimension_numbers = #tpu.dot_dimension_numbers<[1], [0], [0], [1], [0, 0, 1, 1], [], []>} : vector<64x140xf32>, vector<140x144xf32>, vector<64x144xf32> -> vector<64x144xf32>
    %9 = vector.broadcast %7 : vector<1x144xf32> to vector<64x144xf32>
    %10 = arith.addf %8, %9 : vector<64x144xf32>
    %cst_8 = arith.constant 0.000000e+00 : f32
    %11 = vector.broadcast %cst_8 : f32 to vector<64x144xf32>
    %12 = arith.maximumf %10, %11 : vector<64x144xf32>
    %13 = tpu.iota {dimensions = array<i32: 0>} : vector<32x64xi32>
    %14 = tpu.iota {dimensions = array<i32: 1>} : vector<32x64xi32>
    %c2_i32 = arith.constant 2 : i32
    %15 = vector.broadcast %c2_i32 : i32 to vector<32x64xi32>
    %16 = arith.muli %15, %13 : vector<32x64xi32>
    %17 = arith.cmpi eq, %14, %16 : vector<32x64xi32>
    %18 = arith.extui %17 : vector<32x64xi1> to vector<32x64xi32>
    %19 = arith.sitofp %18 : vector<32x64xi32> to vector<32x64xf32>
    %c2_i32_9 = arith.constant 2 : i32
    %20 = vector.broadcast %c2_i32_9 : i32 to vector<32x64xi32>
    %21 = arith.muli %20, %13 : vector<32x64xi32>
    %c1_i32 = arith.constant 1 : i32
    %22 = vector.broadcast %c1_i32 : i32 to vector<32x64xi32>
    %23 = arith.addi %21, %22 : vector<32x64xi32>
    %24 = arith.cmpi eq, %14, %23 : vector<32x64xi32>
    %25 = arith.extui %24 : vector<32x64xi1> to vector<32x64xi32>
    %26 = arith.sitofp %25 : vector<32x64xi32> to vector<32x64xf32>
    %cst_10 = arith.constant dense<0.000000e+00> : vector<32x144xf32>
    %27 = tpu.matmul %19, %12, %cst_10 {dimension_numbers = #tpu.dot_dimension_numbers<[1], [0], [0], [1], [0, 0, 1, 1], [], []>} : vector<32x64xf32>, vector<64x144xf32>, vector<32x144xf32> -> vector<32x144xf32>
    %cst_11 = arith.constant dense<0.000000e+00> : vector<32x144xf32>
    %28 = tpu.matmul %26, %12, %cst_11 {dimension_numbers = #tpu.dot_dimension_numbers<[1], [0], [0], [1], [0, 0, 1, 1], [], []>} : vector<32x64xf32>, vector<64x144xf32>, vector<32x144xf32> -> vector<32x144xf32>
    %29 = arith.maximumf %27, %28 : vector<32x144xf32>
    %30 = tpu.iota {dimensions = array<i32: 0>} : vector<144x72xi32>
    %31 = tpu.iota {dimensions = array<i32: 1>} : vector<144x72xi32>
    %c2_i32_12 = arith.constant 2 : i32
    %32 = vector.broadcast %c2_i32_12 : i32 to vector<144x72xi32>
    %33 = arith.muli %32, %31 : vector<144x72xi32>
    %34 = arith.cmpi eq, %30, %33 : vector<144x72xi32>
    %35 = arith.extui %34 : vector<144x72xi1> to vector<144x72xi32>
    %36 = arith.sitofp %35 : vector<144x72xi32> to vector<144x72xf32>
    %c2_i32_13 = arith.constant 2 : i32
    %37 = vector.broadcast %c2_i32_13 : i32 to vector<144x72xi32>
    %38 = arith.muli %37, %31 : vector<144x72xi32>
    %c1_i32_14 = arith.constant 1 : i32
    %39 = vector.broadcast %c1_i32_14 : i32 to vector<144x72xi32>
    %40 = arith.addi %38, %39 : vector<144x72xi32>
    %41 = arith.cmpi eq, %30, %40 : vector<144x72xi32>
    %42 = arith.extui %41 : vector<144x72xi1> to vector<144x72xi32>
    %43 = arith.sitofp %42 : vector<144x72xi32> to vector<144x72xf32>
    %cst_15 = arith.constant dense<0.000000e+00> : vector<32x72xf32>
    %44 = tpu.matmul %29, %36, %cst_15 {dimension_numbers = #tpu.dot_dimension_numbers<[1], [0], [0], [1], [0, 0, 1, 1], [], []>} : vector<32x144xf32>, vector<144x72xf32>, vector<32x72xf32> -> vector<32x72xf32>
    %cst_16 = arith.constant dense<0.000000e+00> : vector<32x72xf32>
    %45 = tpu.matmul %29, %43, %cst_16 {dimension_numbers = #tpu.dot_dimension_numbers<[1], [0], [0], [1], [0, 0, 1, 1], [], []>} : vector<32x144xf32>, vector<144x72xf32>, vector<32x72xf32> -> vector<32x72xf32>
    %46 = arith.maximumf %44, %45 : vector<32x72xf32>
    %cst_17 = arith.constant 0.000000e+00 : f32
    %47 = vector.broadcast %cst_17 : f32 to vector<8x72xf32>
    %48 = tpu.concatenate %46, %47 in 0 : vector<32x72xf32>, vector<8x72xf32> -> vector<40x72xf32>
    %49 = vector.extract_strided_slice %48 {offsets = [0, 0], sizes = [32, 72], strides = [1, 1]} : vector<40x72xf32> to vector<32x72xf32>
    %50 = vector.extract_strided_slice %48 {offsets = [1, 0], sizes = [32, 72], strides = [1, 1]} : vector<40x72xf32> to vector<32x72xf32>
    %51 = vector.extract_strided_slice %48 {offsets = [2, 0], sizes = [32, 72], strides = [1, 1]} : vector<40x72xf32> to vector<32x72xf32>
    %52 = vector.extract_strided_slice %48 {offsets = [3, 0], sizes = [32, 72], strides = [1, 1]} : vector<40x72xf32> to vector<32x72xf32>
    %53 = vector.extract_strided_slice %48 {offsets = [4, 0], sizes = [32, 72], strides = [1, 1]} : vector<40x72xf32> to vector<32x72xf32>
    %54 = tpu.concatenate %49, %50, %51, %52, %53 in 1 : vector<32x72xf32>, vector<32x72xf32>, vector<32x72xf32>, vector<32x72xf32>, vector<32x72xf32> -> vector<32x360xf32>
    %c144 = arith.constant 144 : index
    %c0_18 = arith.constant 0 : index
    %55 = vector.load %arg1[%c144, %c0_18] : memref<884x144xf32, #tpu.memory_space<vmem>>, vector<360x128xf32>
    %c881 = arith.constant 881 : index
    %c0_19 = arith.constant 0 : index
    %56 = vector.load %arg1[%c881, %c0_19] : memref<884x144xf32, #tpu.memory_space<vmem>>, vector<1x128xf32>
    %cst_20 = arith.constant dense<0.000000e+00> : vector<32x128xf32>
    %57 = tpu.matmul %54, %55, %cst_20 {dimension_numbers = #tpu.dot_dimension_numbers<[1], [0], [0], [1], [0, 0, 1, 1], [], []>} : vector<32x360xf32>, vector<360x128xf32>, vector<32x128xf32> -> vector<32x128xf32>
    %58 = vector.broadcast %56 : vector<1x128xf32> to vector<32x128xf32>
    %59 = arith.addf %57, %58 : vector<32x128xf32>
    %cst_21 = arith.constant 0.000000e+00 : f32
    %60 = vector.broadcast %cst_21 : f32 to vector<32x128xf32>
    %61 = arith.maximumf %59, %60 : vector<32x128xf32>
    %62 = tpu.iota {dimensions = array<i32: 0>} : vector<16x32xi32>
    %63 = tpu.iota {dimensions = array<i32: 1>} : vector<16x32xi32>
    %c2_i32_22 = arith.constant 2 : i32
    %64 = vector.broadcast %c2_i32_22 : i32 to vector<16x32xi32>
    %65 = arith.muli %64, %62 : vector<16x32xi32>
    %66 = arith.cmpi eq, %63, %65 : vector<16x32xi32>
    %67 = arith.extui %66 : vector<16x32xi1> to vector<16x32xi32>
    %68 = arith.sitofp %67 : vector<16x32xi32> to vector<16x32xf32>
    %c2_i32_23 = arith.constant 2 : i32
    %69 = vector.broadcast %c2_i32_23 : i32 to vector<16x32xi32>
    %70 = arith.muli %69, %62 : vector<16x32xi32>
    %c1_i32_24 = arith.constant 1 : i32
    %71 = vector.broadcast %c1_i32_24 : i32 to vector<16x32xi32>
    %72 = arith.addi %70, %71 : vector<16x32xi32>
    %73 = arith.cmpi eq, %63, %72 : vector<16x32xi32>
    %74 = arith.extui %73 : vector<16x32xi1> to vector<16x32xi32>
    %75 = arith.sitofp %74 : vector<16x32xi32> to vector<16x32xf32>
    %cst_25 = arith.constant dense<0.000000e+00> : vector<16x128xf32>
    %76 = tpu.matmul %68, %61, %cst_25 {dimension_numbers = #tpu.dot_dimension_numbers<[1], [0], [0], [1], [0, 0, 1, 1], [], []>} : vector<16x32xf32>, vector<32x128xf32>, vector<16x128xf32> -> vector<16x128xf32>
    %cst_26 = arith.constant dense<0.000000e+00> : vector<16x128xf32>
    %77 = tpu.matmul %75, %61, %cst_26 {dimension_numbers = #tpu.dot_dimension_numbers<[1], [0], [0], [1], [0, 0, 1, 1], [], []>} : vector<16x32xf32>, vector<32x128xf32>, vector<16x128xf32> -> vector<16x128xf32>
    %78 = arith.maximumf %76, %77 : vector<16x128xf32>
    %79 = tpu.iota {dimensions = array<i32: 0>} : vector<128x64xi32>
    %80 = tpu.iota {dimensions = array<i32: 1>} : vector<128x64xi32>
    %c2_i32_27 = arith.constant 2 : i32
    %81 = vector.broadcast %c2_i32_27 : i32 to vector<128x64xi32>
    %82 = arith.muli %81, %80 : vector<128x64xi32>
    %83 = arith.cmpi eq, %79, %82 : vector<128x64xi32>
    %84 = arith.extui %83 : vector<128x64xi1> to vector<128x64xi32>
    %85 = arith.sitofp %84 : vector<128x64xi32> to vector<128x64xf32>
    %c2_i32_28 = arith.constant 2 : i32
    %86 = vector.broadcast %c2_i32_28 : i32 to vector<128x64xi32>
    %87 = arith.muli %86, %80 : vector<128x64xi32>
    %c1_i32_29 = arith.constant 1 : i32
    %88 = vector.broadcast %c1_i32_29 : i32 to vector<128x64xi32>
    %89 = arith.addi %87, %88 : vector<128x64xi32>
    %90 = arith.cmpi eq, %79, %89 : vector<128x64xi32>
    %91 = arith.extui %90 : vector<128x64xi1> to vector<128x64xi32>
    %92 = arith.sitofp %91 : vector<128x64xi32> to vector<128x64xf32>
    %cst_30 = arith.constant dense<0.000000e+00> : vector<16x64xf32>
    %93 = tpu.matmul %78, %85, %cst_30 {dimension_numbers = #tpu.dot_dimension_numbers<[1], [0], [0], [1], [0, 0, 1, 1], [], []>} : vector<16x128xf32>, vector<128x64xf32>, vector<16x64xf32> -> vector<16x64xf32>
    %cst_31 = arith.constant dense<0.000000e+00> : vector<16x64xf32>
    %94 = tpu.matmul %78, %92, %cst_31 {dimension_numbers = #tpu.dot_dimension_numbers<[1], [0], [0], [1], [0, 0, 1, 1], [], []>} : vector<16x128xf32>, vector<128x64xf32>, vector<16x64xf32> -> vector<16x64xf32>
    %95 = arith.maximumf %93, %94 : vector<16x64xf32>
    %96 = tpu.iota {dimensions = array<i32: 0>} : vector<2x16xi32>
    %97 = tpu.iota {dimensions = array<i32: 1>} : vector<2x16xi32>
    %c8_i32 = arith.constant 8 : i32
    %98 = vector.broadcast %c8_i32 : i32 to vector<2x16xi32>
    %99 = arith.muli %98, %96 : vector<2x16xi32>
    %c0_i32 = arith.constant 0 : i32
    %100 = vector.broadcast %c0_i32 : i32 to vector<2x16xi32>
    %101 = arith.addi %99, %100 : vector<2x16xi32>
    %102 = arith.cmpi eq, %97, %101 : vector<2x16xi32>
    %103 = arith.extui %102 : vector<2x16xi1> to vector<2x16xi32>
    %104 = arith.sitofp %103 : vector<2x16xi32> to vector<2x16xf32>
    %cst_32 = arith.constant dense<0.000000e+00> : vector<2x64xf32>
    %105 = tpu.matmul %104, %95, %cst_32 {dimension_numbers = #tpu.dot_dimension_numbers<[1], [0], [0], [1], [0, 0, 1, 1], [], []>} : vector<2x16xf32>, vector<16x64xf32>, vector<2x64xf32> -> vector<2x64xf32>
    %106 = tpu.iota {dimensions = array<i32: 0>} : vector<2x16xi32>
    %107 = tpu.iota {dimensions = array<i32: 1>} : vector<2x16xi32>
    %c8_i32_33 = arith.constant 8 : i32
    %108 = vector.broadcast %c8_i32_33 : i32 to vector<2x16xi32>
    %109 = arith.muli %108, %106 : vector<2x16xi32>
    %c1_i32_34 = arith.constant 1 : i32
    %110 = vector.broadcast %c1_i32_34 : i32 to vector<2x16xi32>
    %111 = arith.addi %109, %110 : vector<2x16xi32>
    %112 = arith.cmpi eq, %107, %111 : vector<2x16xi32>
    %113 = arith.extui %112 : vector<2x16xi1> to vector<2x16xi32>
    %114 = arith.sitofp %113 : vector<2x16xi32> to vector<2x16xf32>
    %cst_35 = arith.constant dense<0.000000e+00> : vector<2x64xf32>
    %115 = tpu.matmul %114, %95, %cst_35 {dimension_numbers = #tpu.dot_dimension_numbers<[1], [0], [0], [1], [0, 0, 1, 1], [], []>} : vector<2x16xf32>, vector<16x64xf32>, vector<2x64xf32> -> vector<2x64xf32>
    %116 = tpu.iota {dimensions = array<i32: 0>} : vector<2x16xi32>
    %117 = tpu.iota {dimensions = array<i32: 1>} : vector<2x16xi32>
    %c8_i32_36 = arith.constant 8 : i32
    %118 = vector.broadcast %c8_i32_36 : i32 to vector<2x16xi32>
    %119 = arith.muli %118, %116 : vector<2x16xi32>
    %c2_i32_37 = arith.constant 2 : i32
    %120 = vector.broadcast %c2_i32_37 : i32 to vector<2x16xi32>
    %121 = arith.addi %119, %120 : vector<2x16xi32>
    %122 = arith.cmpi eq, %117, %121 : vector<2x16xi32>
    %123 = arith.extui %122 : vector<2x16xi1> to vector<2x16xi32>
    %124 = arith.sitofp %123 : vector<2x16xi32> to vector<2x16xf32>
    %cst_38 = arith.constant dense<0.000000e+00> : vector<2x64xf32>
    %125 = tpu.matmul %124, %95, %cst_38 {dimension_numbers = #tpu.dot_dimension_numbers<[1], [0], [0], [1], [0, 0, 1, 1], [], []>} : vector<2x16xf32>, vector<16x64xf32>, vector<2x64xf32> -> vector<2x64xf32>
    %126 = tpu.iota {dimensions = array<i32: 0>} : vector<2x16xi32>
    %127 = tpu.iota {dimensions = array<i32: 1>} : vector<2x16xi32>
    %c8_i32_39 = arith.constant 8 : i32
    %128 = vector.broadcast %c8_i32_39 : i32 to vector<2x16xi32>
    %129 = arith.muli %128, %126 : vector<2x16xi32>
    %c3_i32 = arith.constant 3 : i32
    %130 = vector.broadcast %c3_i32 : i32 to vector<2x16xi32>
    %131 = arith.addi %129, %130 : vector<2x16xi32>
    %132 = arith.cmpi eq, %127, %131 : vector<2x16xi32>
    %133 = arith.extui %132 : vector<2x16xi1> to vector<2x16xi32>
    %134 = arith.sitofp %133 : vector<2x16xi32> to vector<2x16xf32>
    %cst_40 = arith.constant dense<0.000000e+00> : vector<2x64xf32>
    %135 = tpu.matmul %134, %95, %cst_40 {dimension_numbers = #tpu.dot_dimension_numbers<[1], [0], [0], [1], [0, 0, 1, 1], [], []>} : vector<2x16xf32>, vector<16x64xf32>, vector<2x64xf32> -> vector<2x64xf32>
    %136 = tpu.concatenate %105, %115, %125, %135 in 1 : vector<2x64xf32>, vector<2x64xf32>, vector<2x64xf32>, vector<2x64xf32> -> vector<2x256xf32>
    %c504 = arith.constant 504 : index
    %c0_41 = arith.constant 0 : index
    %137 = vector.load %arg1[%c504, %c0_41] : memref<884x144xf32, #tpu.memory_space<vmem>>, vector<256x120xf32>
    %c882 = arith.constant 882 : index
    %c0_42 = arith.constant 0 : index
    %138 = vector.load %arg1[%c882, %c0_42] : memref<884x144xf32, #tpu.memory_space<vmem>>, vector<1x120xf32>
    %cst_43 = arith.constant dense<0.000000e+00> : vector<2x120xf32>
    %139 = tpu.matmul %136, %137, %cst_43 {dimension_numbers = #tpu.dot_dimension_numbers<[1], [0], [0], [1], [0, 0, 1, 1], [], []>} : vector<2x256xf32>, vector<256x120xf32>, vector<2x120xf32> -> vector<2x120xf32>
    %140 = vector.broadcast %138 : vector<1x120xf32> to vector<2x120xf32>
    %141 = arith.addf %139, %140 : vector<2x120xf32>
    %cst_44 = arith.constant 0.000000e+00 : f32
    %142 = vector.broadcast %cst_44 : f32 to vector<2x120xf32>
    %143 = arith.maximumf %141, %142 : vector<2x120xf32>
    %c760 = arith.constant 760 : index
    %c0_45 = arith.constant 0 : index
    %144 = vector.load %arg1[%c760, %c0_45] : memref<884x144xf32, #tpu.memory_space<vmem>>, vector<120x10xf32>
    %c883 = arith.constant 883 : index
    %c0_46 = arith.constant 0 : index
    %145 = vector.load %arg1[%c883, %c0_46] : memref<884x144xf32, #tpu.memory_space<vmem>>, vector<1x10xf32>
    %cst_47 = arith.constant dense<0.000000e+00> : vector<2x10xf32>
    %146 = tpu.matmul %143, %144, %cst_47 {dimension_numbers = #tpu.dot_dimension_numbers<[1], [0], [0], [1], [0, 0, 1, 1], [], []>} : vector<2x120xf32>, vector<120x10xf32>, vector<2x10xf32> -> vector<2x10xf32>
    %147 = vector.broadcast %145 : vector<1x10xf32> to vector<2x10xf32>
    %148 = arith.addf %146, %147 : vector<2x10xf32>
    %c0_48 = arith.constant 0 : index
    %c0_49 = arith.constant 0 : index
    %149 = vector.load %arg2[%c0_48, %c0_49] : memref<2x10xf32, #tpu.memory_space<vmem>>, vector<2x10xf32>
    tpu.vector_store %arg2[%c0_48, %c0_49], %148 {strides = array<i32>} : memref<2x10xf32, #tpu.memory_space<vmem>>, vector<2x10xf32>,
    return
  }
}

</mosaic_0001>

<llo_original>
// kernel: tpu_custom_call.1
$region0: #{tpu_custom_call.1}
  #allocation0 [shape = 'u32[]', space=smem, size = 0x4, offset = 0x4, fixed_abs, tag = 'smem constant byte address 0x4 - core index']
  #allocation1 [shape = 'u32[144,128]{1,0:T(1,128)}', space=vmem, size = 0x12000, scoped, tag = 'internal scratch']
  %s0 = inlined_call_operand.vmem [shape: f32[72,28], index: 0, kind: input, shape index: {}]
  %s1 = inlined_call_operand.vmem [shape: f32[884,144], index: 1, kind: input, shape index: {}]
  %s2 = inlined_call_operand.hbm [shape: f32[2,10], index: 2, kind: output, shape index: {}]
  %s3 = sld [smem:[#allocation0]]
  $region18: #{tpu_custom_call.1} parent=0
    _
  %s5 = ssub.s32 1, %s3
  %s6 = scalar_select 0, %s5, %s3
  $region1: #{tpu_custom_call.1} parent=0
    #allocation2 [shape = 'u8[1024]{0}', space=vmem, size = 0x400, scoped, tag = 'output window, operand 0, single buffered']
    #allocation3 [shape = 's32[1]{0}', space=sflag, size = 0x4, scoped, tag = 'scoped memory for tpu_custom_call.1']
    %7 = vsyncpa [#allocation3], 0
    // Predicated region
    $region2: #{tpu_custom_call.1} parent=1 // pred_check
      _
    $region3: #{tpu_custom_call.1} parent=1 // pred_check_branch
      %9 = sbr.rel (0) target = $region5
    $region4: #{tpu_custom_call.1} parent=1 // pred_region
      _
    $region5: #{tpu_custom_call.1} parent=1 // pred_fallthru
      _
    // Predicated region
    $region6: #{tpu_custom_call.1} parent=1 // pred_check
      _
    $region7: #{tpu_custom_call.1} parent=1 // pred_check_branch
      %11 = sbr.rel (0) target = $region9
    $region8: #{tpu_custom_call.1} parent=1 // pred_region
      _
    $region9: #{tpu_custom_call.1} parent=1 // pred_fallthru
      _
    %v12 = vld [vmem:[%s0] sm:$0xff]
    %v13 = vld [vmem:[%s0 + $0x8] sm:$0xff]
    %v14 = vld [vmem:[%s0 + $0x10] sm:$0xff]
    %v15 = vld [vmem:[%s0 + $0x18] sm:$0xff]
    %v16 = vld [vmem:[%s0 + $0x20] sm:$0xff]
    %v17 = vld [vmem:[%s0 + $0x28] sm:$0xff]
    %v18 = vld [vmem:[%s0 + $0x30] sm:$0xff]
    %v19 = vld [vmem:[%s0 + $0x38] sm:$0xff]
    %v20 = vld [vmem:[%s0 + $0x1] sm:$0xff]
    %v21 = vld [vmem:[%s0 + $0x9] sm:$0xff]
    %v22 = vld [vmem:[%s0 + $0x11] sm:$0xff]
    %v23 = vld [vmem:[%s0 + $0x19] sm:$0xff]
    %v24 = vld [vmem:[%s0 + $0x21] sm:$0xff]
    %v25 = vld [vmem:[%s0 + $0x29] sm:$0xff]
    %v26 = vld [vmem:[%s0 + $0x31] sm:$0xff]
    %v27 = vld [vmem:[%s0 + $0x39] sm:$0xff]
    %v28 = vld [vmem:[%s0 + $0x2] sm:$0xff]
    %v29 = vld [vmem:[%s0 + $0xa] sm:$0xff]
    %v30 = vld [vmem:[%s0 + $0x12] sm:$0xff]
    %v31 = vld [vmem:[%s0 + $0x1a] sm:$0xff]
    %v32 = vld [vmem:[%s0 + $0x22] sm:$0xff]
    %v33 = vld [vmem:[%s0 + $0x2a] sm:$0xff]
    %v34 = vld [vmem:[%s0 + $0x32] sm:$0xff]
    %v35 = vld [vmem:[%s0 + $0x3a] sm:$0xff]
    %v36 = vld [vmem:[%s0 + $0x3] sm:$0xff]
    %v37 = vld [vmem:[%s0 + $0xb] sm:$0xff]
    %v38 = vld [vmem:[%s0 + $0x13] sm:$0xff]
    %v39 = vld [vmem:[%s0 + $0x1b] sm:$0xff]
    %v40 = vld [vmem:[%s0 + $0x23] sm:$0xff]
    %v41 = vld [vmem:[%s0 + $0x2b] sm:$0xff]
    %v42 = vld [vmem:[%s0 + $0x33] sm:$0xff]
    %v43 = vld [vmem:[%s0 + $0x3b] sm:$0xff]
    %v44 = vld [vmem:[%s0 + $0x4] sm:$0xff]
    %v45 = vld [vmem:[%s0 + $0xc] sm:$0xff]
    %v46 = vld [vmem:[%s0 + $0x14] sm:$0xff]
    %v47 = vld [vmem:[%s0 + $0x1c] sm:$0xff]
    %v48 = vld [vmem:[%s0 + $0x24] sm:$0xff]
    %v49 = vld [vmem:[%s0 + $0x2c] sm:$0xff]
    %v50 = vld [vmem:[%s0 + $0x34] sm:$0xff]
    %v51 = vld [vmem:[%s0 + $0x3c] sm:$0xff]
    %60 = vrot.lane.b32.xlu0 %v20, 28
    %v61 = vpop.permute.xlu0 %60
    %62 = vrot.lane.b32.xlu0 %v21, 28
    %v63 = vpop.permute.xlu0 %62
    %64 = vrot.lane.b32.xlu0 %v22, 28
    %v65 = vpop.permute.xlu0 %64
    %66 = vrot.lane.b32.xlu0 %v23, 28
    %v67 = vpop.permute.xlu0 %66
    %68 = vrot.lane.b32.xlu0 %v24, 28
    %v69 = vpop.permute.xlu0 %68
    %70 = vrot.lane.b32.xlu0 %v25, 28
    %v71 = vpop.permute.xlu0 %70
    %72 = vrot.lane.b32.xlu0 %v26, 28
    %v73 = vpop.permute.xlu0 %72
    %74 = vrot.lane.b32.xlu0 %v27, 28
    %v75 = vpop.permute.xlu0 %74
    %92 = vrot.lane.b32.xlu0 %v28, 56
    %v93 = vpop.permute.xlu0 %92
    %94 = vrot.lane.b32.xlu0 %v29, 56
    %v95 = vpop.permute.xlu0 %94
    %96 = vrot.lane.b32.xlu0 %v30, 56
    %v97 = vpop.permute.xlu0 %96
    %98 = vrot.lane.b32.xlu0 %v31, 56
    %v99 = vpop.permute.xlu0 %98
    %100 = vrot.lane.b32.xlu0 %v32, 56
    %v101 = vpop.permute.xlu0 %100
    %102 = vrot.lane.b32.xlu0 %v33, 56
    %v103 = vpop.permute.xlu0 %102
    %104 = vrot.lane.b32.xlu0 %v34, 56
    %v105 = vpop.permute.xlu0 %104
    %106 = vrot.lane.b32.xlu0 %v35, 56
    %v107 = vpop.permute.xlu0 %106
    %124 = vrot.lane.b32.xlu0 %v36, 84
    %v125 = vpop.permute.xlu0 %124
    %126 = vrot.lane.b32.xlu0 %v37, 84
    %v127 = vpop.permute.xlu0 %126
    %128 = vrot.lane.b32.xlu0 %v38, 84
    %v129 = vpop.permute.xlu0 %128
    %130 = vrot.lane.b32.xlu0 %v39, 84
    %v131 = vpop.permute.xlu0 %130
    %132 = vrot.lane.b32.xlu0 %v40, 84
    %v133 = vpop.permute.xlu0 %132
    %134 = vrot.lane.b32.xlu0 %v41, 84
    %v135 = vpop.permute.xlu0 %134
    %136 = vrot.lane.b32.xlu0 %v42, 84
    %v137 = vpop.permute.xlu0 %136
    %138 = vrot.lane.b32.xlu0 %v43, 84
    %v139 = vpop.permute.xlu0 %138
    %156 = vrot.lane.b32.xlu0 %v44, 112
    %v157 = vpop.permute.xlu0 %156
    %158 = vrot.lane.b32.xlu0 %v45, 112
    %v159 = vpop.permute.xlu0 %158
    %160 = vrot.lane.b32.xlu0 %v46, 112
    %v161 = vpop.permute.xlu0 %160
    %162 = vrot.lane.b32.xlu0 %v47, 112
    %v163 = vpop.permute.xlu0 %162
    %164 = vrot.lane.b32.xlu0 %v48, 112
    %v165 = vpop.permute.xlu0 %164
    %166 = vrot.lane.b32.xlu0 %v49, 112
    %v167 = vpop.permute.xlu0 %166
    %168 = vrot.lane.b32.xlu0 %v50, 112
    %v169 = vpop.permute.xlu0 %168
    %170 = vrot.lane.b32.xlu0 %v51, 112
    %v171 = vpop.permute.xlu0 %170
    %vm180 = vcmask 228352
    %v181 = vsel %vm180, %v12, %v61
    %v182 = vsel %vm180, %v13, %v63
    %v183 = vsel %vm180, %v14, %v65
    %v184 = vsel %vm180, %v15, %v67
    %v185 = vsel %vm180, %v16, %v69
    %v186 = vsel %vm180, %v17, %v71
    %v187 = vsel %vm180, %v18, %v73
    %v188 = vsel %vm180, %v19, %v75
    %vm189 = vcmask 457728
    %v190 = vsel %vm189, %v181, %v93
    %v191 = vsel %vm189, %v182, %v95
    %v192 = vsel %vm189, %v183, %v97
    %v193 = vsel %vm189, %v184, %v99
    %v194 = vsel %vm189, %v185, %v101
    %v195 = vsel %vm189, %v186, %v103
    %v196 = vsel %vm189, %v187, %v105
    %v197 = vsel %vm189, %v188, %v107
    %vm198 = vcmask 687104
    %v199 = vsel %vm198, %v190, %v125
    %v200 = vsel %vm198, %v191, %v127
    %v201 = vsel %vm198, %v192, %v129
    %v202 = vsel %vm198, %v193, %v131
    %v203 = vsel %vm198, %v194, %v133
    %v204 = vsel %vm198, %v195, %v135
    %v205 = vsel %vm198, %v196, %v137
    %v206 = vsel %vm198, %v197, %v139
    %vm207 = vcmask 916480
    %v208 = vsel %vm207, %v199, %v157
    %v209 = vsel %vm207, %v200, %v159
    %v210 = vsel %vm207, %v201, %v161
    %v211 = vsel %vm207, %v202, %v163
    %v212 = vsel %vm207, %v203, %v165
    %v213 = vsel %vm207, %v204, %v167
    %v214 = vsel %vm207, %v205, %v169
    %v215 = vsel %vm207, %v206, %v171
    %v216 = vld [vmem:[%s1] sm:$0xff]
    %v217 = vld [vmem:[%s1 + $0x8] sm:$0xff]
    %v218 = vld [vmem:[%s1 + $0x10] sm:$0xff]
    %v219 = vld [vmem:[%s1 + $0x18] sm:$0xff]
    %v220 = vld [vmem:[%s1 + $0x20] sm:$0xff]
    %v221 = vld [vmem:[%s1 + $0x28] sm:$0xff]
    %v222 = vld [vmem:[%s1 + $0x30] sm:$0xff]
    %v223 = vld [vmem:[%s1 + $0x38] sm:$0xff]
    %v224 = vld [vmem:[%s1 + $0x40] sm:$0xff]
    %v225 = vld [vmem:[%s1 + $0x48] sm:$0xff]
    %v226 = vld [vmem:[%s1 + $0x50] sm:$0xff]
    %v227 = vld [vmem:[%s1 + $0x58] sm:$0xff]
    %v228 = vld [vmem:[%s1 + $0x60] sm:$0xff]
    %v229 = vld [vmem:[%s1 + $0x68] sm:$0xff]
    %v230 = vld [vmem:[%s1 + $0x70] sm:$0xff]
    %v231 = vld [vmem:[%s1 + $0x78] sm:$0xff]
    %v232 = vld [vmem:[%s1 + $0x80] sm:$0xff]
    %v233 = vld [vmem:[%s1 + $0x88] sm:$0xff]
    %v234 = vld [vmem:[%s1 + $0x90] sm:$0xff]
    %v235 = vld [vmem:[%s1 + $0x98] sm:$0xff]
    %v236 = vld [vmem:[%s1 + $0xa0] sm:$0xff]
    %v237 = vld [vmem:[%s1 + $0xa8] sm:$0xff]
    %v238 = vld [vmem:[%s1 + $0xb0] sm:$0xff]
    %v239 = vld [vmem:[%s1 + $0xb8] sm:$0xff]
    %v240 = vld [vmem:[%s1 + $0xc0] sm:$0xff]
    %v241 = vld [vmem:[%s1 + $0xc8] sm:$0xff]
    %v242 = vld [vmem:[%s1 + $0xd0] sm:$0xff]
    %v243 = vld [vmem:[%s1 + $0xd8] sm:$0xff]
    %v244 = vld [vmem:[%s1 + $0xe0] sm:$0xff]
    %v245 = vld [vmem:[%s1 + $0xe8] sm:$0xff]
    %v246 = vld [vmem:[%s1 + $0xf0] sm:$0xff]
    %v247 = vld [vmem:[%s1 + $0xf8] sm:$0xff]
    %v248 = vld [vmem:[%s1 + $0x100] sm:$0xff]
    %v249 = vld [vmem:[%s1 + $0x108] sm:$0xff]
    %v250 = vld [vmem:[%s1 + $0x110] sm:$0xf]
    %v251 = vld [vmem:[%s1 + $0x118] sm:$0xf]
    %s252 = scalar_lea.vmem %s1, 1760
    %v253 = vld [vmem:[%s252] ss:$8 sm:$0x3]
    %v255 = vlaneseq
    %v256 = vshrl.u32 %v255, 7
    %v257 = vsub.s32 0, %v256
    %v258 = vrot.slane %v253, %v257
    %v259 = vlaneseq
    %v260 = vshrl.u32 %v259, 7
    %v261 = vsub.s32 1, %v260
    %v262 = vrot.slane %v253, %v261
    %vm265 = vcmask 97280
    %v266 = vsel %vm265, %v157, 0
    %v268 = vsel %vm265, %v159, 0
    %v270 = vsel %vm265, %v161, 0
    %v272 = vsel %vm265, %v163, 0
    %v274 = vsel %vm265, %v165, 0
    %v276 = vsel %vm265, %v167, 0
    %v278 = vsel %vm265, %v169, 0
    %v280 = vsel %vm265, %v171, 0
    %vm282 = vcmask 1043456
    %v284 = vsel %vm282, %v250, 0
    %v287 = vsel %vm282, %v251, 0
    %289 = vmatprep.subr.mxu0 %v217
    %290 = vmatpush1.msra.mxu0 %v216
    %291 = vmatprep.subr.mxu0 %v219
    %292 = vmatpush1.msra.mxu0 %v218
    %293 = vmatprep.subr.mxu0 %v221
    %294 = vmatpush1.msra.mxu0 %v220
    %295 = vmatprep.subr.mxu0 %v223
    %296 = vmatpush1.msra.mxu0 %v222
    %297 = vmatprep.subr.mxu0 %v225
    %298 = vmatpush1.msra.mxu0 %v224
    %299 = vmatprep.subr.mxu0 %v227
    %300 = vmatpush1.msra.mxu0 %v226
    %301 = vmatprep.subr.mxu0 %v229
    %302 = vmatpush1.msra.mxu0 %v228
    %303 = vmatprep.subr.mxu0 %v231
    %304 = vmatpush1.msra.mxu0 %v230
    %305 = vmatprep.subr.mxu0 %v233
    %306 = vmatpush1.msra.mxu0 %v232
    %307 = vmatprep.subr.mxu0 %v235
    %308 = vmatpush1.msra.mxu0 %v234
    %309 = vmatprep.subr.mxu0 %v237
    %310 = vmatpush1.msra.mxu0 %v236
    %311 = vmatprep.subr.mxu0 %v239
    %312 = vmatpush1.msra.mxu0 %v238
    %313 = vmatprep.subr.mxu0 %v241
    %314 = vmatpush1.msra.mxu0 %v240
    %315 = vmatprep.subr.mxu0 %v243
    %316 = vmatpush1.msra.mxu0 %v242
    %317 = vmatprep.subr.mxu0 %v245
    %318 = vmatpush1.msra.mxu0 %v244
    %319 = vmatprep.subr.mxu0 %v247
    %320 = vmatpush1.msra.mxu0 %v246
    %321 = vmatprep.subr.mxu0 %v249
    %322 = vmatpush1.msra.mxu0 %v248
    %323 = vmatprep.subr.mxu0 %v287
    %324 = vmatpush1.msra.mxu0 %v284
    %325 = vmatprep.subr.mxu0 0.0
    %326 = vmatpush1.msra.mxu0 0.0
    %327 = vmatprep.subr.mxu0 0.0
    %328 = vmatpush1.msra.mxu0 0.0
    %329 = vmatprep.subr.mxu0 0.0
    %330 = vmatpush1.msra.mxu0 0.0
    %331 = vmatprep.subr.mxu0 0.0
    %332 = vmatpush1.msra.mxu0 0.0
    %333 = vmatprep.subr.mxu0 0.0
    %334 = vmatpush1.msra.mxu0 0.0
    %335 = vmatprep.subr.mxu0 0.0
    %336 = vmatpush1.msra.mxu0 0.0
    %337 = vmatprep.subr.mxu0 0.0
    %338 = vmatpush1.msra.mxu0 0.0
    %339 = vmatprep.subr.mxu0 0.0
    %340 = vmatpush1.msra.mxu0 0.0
    %341 = vmatprep.subr.mxu0 0.0
    %342 = vmatpush1.msra.mxu0 0.0
    %343 = vmatprep.subr.mxu0 0.0
    %344 = vmatpush1.msra.mxu0 0.0
    %345 = vmatprep.subr.mxu0 0.0
    %346 = vmatpush1.msra.mxu0 0.0
    %347 = vmatprep.subr.mxu0 0.0
    %348 = vmatpush1.msra.mxu0 0.0
    %349 = vmatprep.subr.mxu0 0.0
    %350 = vmatpush1.msra.mxu0 0.0
    %351 = vmatprep.subr.mxu0 0.0
    %352 = vmatpush1.msra.mxu0 0.0
    %353 = vmatprep.mubr.f32.mxu0 %v266
    %354 = vmatmul.mubr.f32.gmra.mrb[0].mxu0 %v208
    %v355 = vpop.f32.mrb[0].mxu0
    %v356 = vadd.f32 %v258, %v355
    %v357 = vpop.f32.mrb[0].mxu0
    %v358 = vadd.f32 %v262, %v357
    %359 = vmatprep.mubr.f32.mxu0 %v268
    %360 = vmatmul.mubr.f32.gmra.mrb[0].mxu0 %v209
    %v361 = vpop.f32.mrb[0].mxu0
    %v362 = vadd.f32 %v258, %v361
    %v363 = vpop.f32.mrb[0].mxu0
    %v364 = vadd.f32 %v262, %v363
    %365 = vmatprep.mubr.f32.mxu0 %v270
    %366 = vmatmul.mubr.f32.gmra.mrb[0].mxu0 %v210
    %v367 = vpop.f32.mrb[0].mxu0
    %v368 = vadd.f32 %v258, %v367
    %v369 = vpop.f32.mrb[0].mxu0
    %v370 = vadd.f32 %v262, %v369
    %371 = vmatprep.mubr.f32.mxu0 %v272
    %372 = vmatmul.mubr.f32.gmra.mrb[0].mxu0 %v211
    %v373 = vpop.f32.mrb[0].mxu0
    %v374 = vadd.f32 %v258, %v373
    %v375 = vpop.f32.mrb[0].mxu0
    %v376 = vadd.f32 %v262, %v375
    %377 = vmatprep.mubr.f32.mxu0 %v274
    %378 = vmatmul.mubr.f32.gmra.mrb[0].mxu0 %v212
    %v379 = vpop.f32.mrb[0].mxu0
    %v380 = vadd.f32 %v258, %v379
    %v381 = vpop.f32.mrb[0].mxu0
    %v382 = vadd.f32 %v262, %v381
    %383 = vmatprep.mubr.f32.mxu0 %v276
    %384 = vmatmul.mubr.f32.gmra.mrb[0].mxu0 %v213
    %v385 = vpop.f32.mrb[0].mxu0
    %v386 = vadd.f32 %v258, %v385
    %v387 = vpop.f32.mrb[0].mxu0
    %v388 = vadd.f32 %v262, %v387
    %389 = vmatprep.mubr.f32.mxu0 %v278
    %390 = vmatmul.mubr.f32.gmra.mrb[0].mxu0 %v214
    %v391 = vpop.f32.mrb[0].mxu0
    %v392 = vadd.f32 %v258, %v391
    %v393 = vpop.f32.mrb[0].mxu0
    %v394 = vadd.f32 %v262, %v393
    %395 = vmatprep.mubr.f32.mxu0 %v280
    %396 = vmatmul.mubr.f32.gmra.mrb[0].mxu0 %v215
    %v397 = vpop.f32.mrb[0].mxu0
    %v398 = vadd.f32 %v258, %v397
    %v399 = vpop.f32.mrb[0].mxu0
    %v400 = vadd.f32 %v262, %v399
    %401 = vdwg.mxu0
    %v402 = vmax.f32 %v356, 0.0
    %v403 = vmax.f32 %v358, 0.0
    %v404 = vmax.f32 %v362, 0.0
    %v405 = vmax.f32 %v364, 0.0
    %v406 = vmax.f32 %v368, 0.0
    %v407 = vmax.f32 %v370, 0.0
    %v408 = vmax.f32 %v374, 0.0
    %v409 = vmax.f32 %v376, 0.0
    %v410 = vmax.f32 %v380, 0.0
    %v411 = vmax.f32 %v382, 0.0
    %v412 = vmax.f32 %v386, 0.0
    %v413 = vmax.f32 %v388, 0.0
    %v414 = vmax.f32 %v392, 0.0
    %v415 = vmax.f32 %v394, 0.0
    %v416 = vmax.f32 %v398, 0.0
    %v417 = vmax.f32 %v400, 0.0
    %v418 = vlaneseq
    %v419 = vshrl.u32 %v418, 7
    %v420 = vadd.s32 %v419, 8
    %v421 = vadd.s32 %v419, 16
    %v422 = vadd.s32 %v419, 24
    %v423 = vlaneseq
    %v424 = vand.u32 %v423, 127
    %v425 = vmul.u32 %v419, 2
    %v426 = vmul.u32 %v420, 2
    %v427 = vmul.u32 %v421, 2
    %v428 = vmul.u32 %v422, 2
    %vm429 = vcmp.eq.s32.totalorder %v424, %v425
    %vm430 = vcmp.eq.s32.totalorder %v424, %v426
    %vm431 = vcmp.eq.s32.totalorder %v424, %v427
    %vm432 = vcmp.eq.s32.totalorder %v424, %v428
    %v433 = vsel %vm429, 1, 0
    %v434 = vsel %vm430, 1, 0
    %v435 = vsel %vm431, 1, 0
    %v436 = vsel %vm432, 1, 0
    %v437 = vcvt.s32.f32 %v433
    %v438 = vcvt.s32.f32 %v434
    %v439 = vcvt.s32.f32 %v435
    %v440 = vcvt.s32.f32 %v436
    %v441 = vadd.s32 %v425, 1
    %v442 = vadd.s32 %v426, 1
    %v443 = vadd.s32 %v427, 1
    %v444 = vadd.s32 %v428, 1
    %vm445 = vcmp.eq.s32.totalorder %v424, %v441
    %vm446 = vcmp.eq.s32.totalorder %v424, %v442
    %vm447 = vcmp.eq.s32.totalorder %v424, %v443
    %vm448 = vcmp.eq.s32.totalorder %v424, %v444
    %v449 = vsel %vm445, 1, 0
    %v450 = vsel %vm446, 1, 0
    %v451 = vsel %vm447, 1, 0
    %v452 = vsel %vm448, 1, 0
    %v453 = vcvt.s32.f32 %v449
    %v454 = vcvt.s32.f32 %v450
    %v455 = vcvt.s32.f32 %v451
    %v456 = vcvt.s32.f32 %v452
    %vm457 = vcmask 523264
    %v459 = vsel %vm457, %v437, 0
    %v462 = vsel %vm457, %v438, 0
    %v465 = vsel %vm457, %v439, 0
    %v468 = vsel %vm457, %v440, 0
    %470 = vmatprep.subr.mxu0 %v403
    %471 = vmatpush1.msra.mxu0 %v402
    %472 = vmatprep.subr.mxu0 %v405
    %473 = vmatpush1.msra.mxu0 %v404
    %474 = vmatprep.subr.mxu0 %v407
    %475 = vmatpush1.msra.mxu0 %v406
    %476 = vmatprep.subr.mxu0 %v409
    %477 = vmatpush1.msra.mxu0 %v408
    %478 = vmatprep.subr.mxu0 %v411
    %479 = vmatpush1.msra.mxu0 %v410
    %480 = vmatprep.subr.mxu0 %v413
    %481 = vmatpush1.msra.mxu0 %v412
    %482 = vmatprep.subr.mxu0 %v415
    %483 = vmatpush1.msra.mxu0 %v414
    %484 = vmatprep.subr.mxu0 %v417
    %485 = vmatpush1.msra.mxu0 %v416
    %486 = vmatprep.subr.mxu0 0.0
    %487 = vmatpush1.msra.mxu0 0.0
    %488 = vmatprep.subr.mxu0 0.0
    %489 = vmatpush1.msra.mxu0 0.0
    %490 = vmatprep.subr.mxu0 0.0
    %491 = vmatpush1.msra.mxu0 0.0
    %492 = vmatprep.subr.mxu0 0.0
    %493 = vmatpush1.msra.mxu0 0.0
    %494 = vmatprep.subr.mxu0 0.0
    %495 = vmatpush1.msra.mxu0 0.0
    %496 = vmatprep.subr.mxu0 0.0
    %497 = vmatpush1.msra.mxu0 0.0
    %498 = vmatprep.subr.mxu0 0.0
    %499 = vmatpush1.msra.mxu0 0.0
    %500 = vmatprep.subr.mxu0 0.0
    %501 = vmatpush1.msra.mxu0 0.0
    %502 = vmatprep.subr.mxu0 0.0
    %503 = vmatpush1.msra.mxu0 0.0
    %504 = vmatprep.subr.mxu0 0.0
    %505 = vmatpush1.msra.mxu0 0.0
    %506 = vmatprep.subr.mxu0 0.0
    %507 = vmatpush1.msra.mxu0 0.0
    %508 = vmatprep.subr.mxu0 0.0
    %509 = vmatpush1.msra.mxu0 0.0
    %510 = vmatprep.subr.mxu0 0.0
    %511 = vmatpush1.msra.mxu0 0.0
    %512 = vmatprep.subr.mxu0 0.0
    %513 = vmatpush1.msra.mxu0 0.0
    %514 = vmatprep.subr.mxu0 0.0
    %515 = vmatpush1.msra.mxu0 0.0
    %516 = vmatprep.subr.mxu0 0.0
    %517 = vmatpush1.msra.mxu0 0.0
    %518 = vmatprep.subr.mxu0 0.0
    %519 = vmatpush1.msra.mxu0 0.0
    %520 = vmatprep.subr.mxu0 0.0
    %521 = vmatpush1.msra.mxu0 0.0
    %522 = vmatprep.subr.mxu0 0.0
    %523 = vmatpush1.msra.mxu0 0.0
    %524 = vmatprep.subr.mxu0 0.0
    %525 = vmatpush1.msra.mxu0 0.0
    %526 = vmatprep.subr.mxu0 0.0
    %527 = vmatpush1.msra.mxu0 0.0
    %528 = vmatprep.subr.mxu0 0.0
    %529 = vmatpush1.msra.mxu0 0.0
    %530 = vmatprep.subr.mxu0 0.0
    %531 = vmatpush1.msra.mxu0 0.0
    %532 = vmatprep.subr.mxu0 0.0
    %533 = vmatpush1.msra.mxu0 0.0
    %534 = vmatprep.mubr.f32.mxu0 0.0
    %535 = vmatmul.mubr.f32.gmra.mrb[0].mxu0 %v459
    %v536 = vpop.f32.mrb[0].mxu0
    %v537 = vadd.f32 0.0, %v536
    %v538 = vpop.f32.mrb[0].mxu0
    %v539 = vadd.f32 0.0, %v538
    %540 = vmatprep.mubr.f32.mxu0 0.0
    %541 = vmatmul.mubr.f32.gmra.mrb[0].mxu0 %v462
    %v542 = vpop.f32.mrb[0].mxu0
    %v543 = vadd.f32 0.0, %v542
    %v544 = vpop.f32.mrb[0].mxu0
    %v545 = vadd.f32 0.0, %v544
    %546 = vmatprep.mubr.f32.mxu0 0.0
    %547 = vmatmul.mubr.f32.gmra.mrb[0].mxu0 %v465
    %v548 = vpop.f32.mrb[0].mxu0
    %v549 = vadd.f32 0.0, %v548
    %v550 = vpop.f32.mrb[0].mxu0
    %v551 = vadd.f32 0.0, %v550
    %552 = vmatprep.mubr.f32.mxu0 0.0
    %553 = vmatmul.mubr.f32.gmra.mrb[0].mxu0 %v468
    %v554 = vpop.f32.mrb[0].mxu0
    %v555 = vadd.f32 0.0, %v554
    %v556 = vpop.f32.mrb[0].mxu0
    %v557 = vadd.f32 0.0, %v556
    %558 = vdwg.mxu0
    %v560 = vsel %vm457, %v453, 0
    %v563 = vsel %vm457, %v454, 0
    %v566 = vsel %vm457, %v455, 0
    %v569 = vsel %vm457, %v456, 0
    %571 = vmatprep.subr.mxu0 %v403
    %572 = vmatpush1.msra.mxu0 %v402
    %573 = vmatprep.subr.mxu0 %v405
    %574 = vmatpush1.msra.mxu0 %v404
    %575 = vmatprep.subr.mxu0 %v407
    %576 = vmatpush1.msra.mxu0 %v406
    %577 = vmatprep.subr.mxu0 %v409
    %578 = vmatpush1.msra.mxu0 %v408
    %579 = vmatprep.subr.mxu0 %v411
    %580 = vmatpush1.msra.mxu0 %v410
    %581 = vmatprep.subr.mxu0 %v413
    %582 = vmatpush1.msra.mxu0 %v412
    %583 = vmatprep.subr.mxu0 %v415
    %584 = vmatpush1.msra.mxu0 %v414
    %585 = vmatprep.subr.mxu0 %v417
    %586 = vmatpush1.msra.mxu0 %v416
    %587 = vmatprep.subr.mxu0 0.0
    %588 = vmatpush1.msra.mxu0 0.0
    %589 = vmatprep.subr.mxu0 0.0
    %590 = vmatpush1.msra.mxu0 0.0
    %591 = vmatprep.subr.mxu0 0.0
    %592 = vmatpush1.msra.mxu0 0.0
    %593 = vmatprep.subr.mxu0 0.0
    %594 = vmatpush1.msra.mxu0 0.0
    %595 = vmatprep.subr.mxu0 0.0
    %596 = vmatpush1.msra.mxu0 0.0
    %597 = vmatprep.subr.mxu0 0.0
    %598 = vmatpush1.msra.mxu0 0.0
    %599 = vmatprep.subr.mxu0 0.0
    %600 = vmatpush1.msra.mxu0 0.0
    %601 = vmatprep.subr.mxu0 0.0
    %602 = vmatpush1.msra.mxu0 0.0
    %603 = vmatprep.subr.mxu0 0.0
    %604 = vmatpush1.msra.mxu0 0.0
    %605 = vmatprep.subr.mxu0 0.0
    %606 = vmatpush1.msra.mxu0 0.0
    %607 = vmatprep.subr.mxu0 0.0
    %608 = vmatpush1.msra.mxu0 0.0
    %609 = vmatprep.subr.mxu0 0.0
    %610 = vmatpush1.msra.mxu0 0.0
    %611 = vmatprep.subr.mxu0 0.0
    %612 = vmatpush1.msra.mxu0 0.0
    %613 = vmatprep.subr.mxu0 0.0
    %614 = vmatpush1.msra.mxu0 0.0
    %615 = vmatprep.subr.mxu0 0.0
    %616 = vmatpush1.msra.mxu0 0.0
    %617 = vmatprep.subr.mxu0 0.0
    %618 = vmatpush1.msra.mxu0 0.0
    %619 = vmatprep.subr.mxu0 0.0
    %620 = vmatpush1.msra.mxu0 0.0
    %621 = vmatprep.subr.mxu0 0.0
    %622 = vmatpush1.msra.mxu0 0.0
    %623 = vmatprep.subr.mxu0 0.0
    %624 = vmatpush1.msra.mxu0 0.0
    %625 = vmatprep.subr.mxu0 0.0
    %626 = vmatpush1.msra.mxu0 0.0
    %627 = vmatprep.subr.mxu0 0.0
    %628 = vmatpush1.msra.mxu0 0.0
    %629 = vmatprep.subr.mxu0 0.0
    %630 = vmatpush1.msra.mxu0 0.0
    %631 = vmatprep.subr.mxu0 0.0
    %632 = vmatpush1.msra.mxu0 0.0
    %633 = vmatprep.subr.mxu0 0.0
    %634 = vmatpush1.msra.mxu0 0.0
    %635 = vmatprep.mubr.f32.mxu0 0.0
    %636 = vmatmul.mubr.f32.gmra.mrb[0].mxu0 %v560
    %v637 = vpop.f32.mrb[0].mxu0
    %v638 = vadd.f32 0.0, %v637
    %v639 = vpop.f32.mrb[0].mxu0
    %v640 = vadd.f32 0.0, %v639
    %641 = vmatprep.mubr.f32.mxu0 0.0
    %642 = vmatmul.mubr.f32.gmra.mrb[0].mxu0 %v563
    %v643 = vpop.f32.mrb[0].mxu0
    %v644 = vadd.f32 0.0, %v643
    %v645 = vpop.f32.mrb[0].mxu0
    %v646 = vadd.f32 0.0, %v645
    %647 = vmatprep.mubr.f32.mxu0 0.0
    %648 = vmatmul.mubr.f32.gmra.mrb[0].mxu0 %v566
    %v649 = vpop.f32.mrb[0].mxu0
    %v650 = vadd.f32 0.0, %v649
    %v651 = vpop.f32.mrb[0].mxu0
    %v652 = vadd.f32 0.0, %v651
    %653 = vmatprep.mubr.f32.mxu0 0.0
    %654 = vmatmul.mubr.f32.gmra.mrb[0].mxu0 %v569
    %v655 = vpop.f32.mrb[0].mxu0
    %v656 = vadd.f32 0.0, %v655
    %v657 = vpop.f32.mrb[0].mxu0
    %v658 = vadd.f32 0.0, %v657
    %659 = vdwg.mxu0
    %v660 = vmax.f32 %v537, %v638
    %v661 = vmax.f32 %v539, %v640
    %v662 = vmax.f32 %v543, %v644
    %v663 = vmax.f32 %v545, %v646
    %v664 = vmax.f32 %v549, %v650
    %v665 = vmax.f32 %v551, %v652
    %v666 = vmax.f32 %v555, %v656
    %v667 = vmax.f32 %v557, %v658
    %v668 = vadd.s32 %v419, 32
    %v669 = vadd.s32 %v419, 40
    %v670 = vadd.s32 %v419, 48
    %v671 = vadd.s32 %v419, 56
    %v672 = vadd.s32 %v419, 64
    %v673 = vadd.s32 %v419, 72
    %v674 = vadd.s32 %v419, 80
    %v675 = vadd.s32 %v419, 88
    %v676 = vadd.s32 %v419, 96
    %v677 = vadd.s32 %v419, 104
    %v678 = vadd.s32 %v419, 112
    %v679 = vadd.s32 %v419, 120
    %v680 = vadd.s32 %v419, 128
    %v681 = vadd.s32 %v419, 136
    %v682 = vmul.u32 %v424, 2
    %vm683 = vcmp.eq.s32.totalorder %v419, %v682
    %vm684 = vcmp.eq.s32.totalorder %v420, %v682
    %vm685 = vcmp.eq.s32.totalorder %v421, %v682
    %vm686 = vcmp.eq.s32.totalorder %v422, %v682
    %vm687 = vcmp.eq.s32.totalorder %v668, %v682
    %vm688 = vcmp.eq.s32.totalorder %v669, %v682
    %vm689 = vcmp.eq.s32.totalorder %v670, %v682
    %vm690 = vcmp.eq.s32.totalorder %v671, %v682
    %vm691 = vcmp.eq.s32.totalorder %v672, %v682
    %vm692 = vcmp.eq.s32.totalorder %v673, %v682
    %vm693 = vcmp.eq.s32.totalorder %v674, %v682
    %vm694 = vcmp.eq.s32.totalorder %v675, %v682
    %vm695 = vcmp.eq.s32.totalorder %v676, %v682
    %vm696 = vcmp.eq.s32.totalorder %v677, %v682
    %vm697 = vcmp.eq.s32.totalorder %v678, %v682
    %vm698 = vcmp.eq.s32.totalorder %v679, %v682
    %vm699 = vcmp.eq.s32.totalorder %v680, %v682
    %vm700 = vcmp.eq.s32.totalorder %v681, %v682
    %v701 = vsel %vm683, 1, 0
    %v702 = vsel %vm684, 1, 0
    %v703 = vsel %vm685, 1, 0
    %v704 = vsel %vm686, 1, 0
    %v705 = vsel %vm687, 1, 0
    %v706 = vsel %vm688, 1, 0
    %v707 = vsel %vm689, 1, 0
    %v708 = vsel %vm690, 1, 0
    %v709 = vsel %vm691, 1, 0
    %v710 = vsel %vm692, 1, 0
    %v711 = vsel %vm693, 1, 0
    %v712 = vsel %vm694, 1, 0
    %v713 = vsel %vm695, 1, 0
    %v714 = vsel %vm696, 1, 0
    %v715 = vsel %vm697, 1, 0
    %v716 = vsel %vm698, 1, 0
    %v717 = vsel %vm699, 1, 0
    %v718 = vsel %vm700, 1, 0
    %v719 = vcvt.s32.f32 %v701
    %v720 = vcvt.s32.f32 %v702
    %v721 = vcvt.s32.f32 %v703
    %v722 = vcvt.s32.f32 %v704
    %v723 = vcvt.s32.f32 %v705
    %v724 = vcvt.s32.f32 %v706
    %v725 = vcvt.s32.f32 %v707
    %v726 = vcvt.s32.f32 %v708
    %v727 = vcvt.s32.f32 %v709
    %v728 = vcvt.s32.f32 %v710
    %v729 = vcvt.s32.f32 %v711
    %v730 = vcvt.s32.f32 %v712
    %v731 = vcvt.s32.f32 %v713
    %v732 = vcvt.s32.f32 %v714
    %v733 = vcvt.s32.f32 %v715
    %v734 = vcvt.s32.f32 %v716
    %v735 = vcvt.s32.f32 %v717
    %v736 = vcvt.s32.f32 %v718
    %v737 = vadd.s32 %v682, 1
    %vm738 = vcmp.eq.s32.totalorder %v419, %v737
    %vm739 = vcmp.eq.s32.totalorder %v420, %v737
    %vm740 = vcmp.eq.s32.totalorder %v421, %v737
    %vm741 = vcmp.eq.s32.totalorder %v422, %v737
    %vm742 = vcmp.eq.s32.totalorder %v668, %v737
    %vm743 = vcmp.eq.s32.totalorder %v669, %v737
    %vm744 = vcmp.eq.s32.totalorder %v670, %v737
    %vm745 = vcmp.eq.s32.totalorder %v671, %v737
    %vm746 = vcmp.eq.s32.totalorder %v672, %v737
    %vm747 = vcmp.eq.s32.totalorder %v673, %v737
    %vm748 = vcmp.eq.s32.totalorder %v674, %v737
    %vm749 = vcmp.eq.s32.totalorder %v675, %v737
    %vm750 = vcmp.eq.s32.totalorder %v676, %v737
    %vm751 = vcmp.eq.s32.totalorder %v677, %v737
    %vm752 = vcmp.eq.s32.totalorder %v678, %v737
    %vm753 = vcmp.eq.s32.totalorder %v679, %v737
    %vm754 = vcmp.eq.s32.totalorder %v680, %v737
    %vm755 = vcmp.eq.s32.totalorder %v681, %v737
    %v756 = vsel %vm738, 1, 0
    %v757 = vsel %vm739, 1, 0
    %v758 = vsel %vm740, 1, 0
    %v759 = vsel %vm741, 1, 0
    %v760 = vsel %vm742, 1, 0
    %v761 = vsel %vm743, 1, 0
    %v762 = vsel %vm744, 1, 0
    %v763 = vsel %vm745, 1, 0
    %v764 = vsel %vm746, 1, 0
    %v765 = vsel %vm747, 1, 0
    %v766 = vsel %vm748, 1, 0
    %v767 = vsel %vm749, 1, 0
    %v768 = vsel %vm750, 1, 0
    %v769 = vsel %vm751, 1, 0
    %v770 = vsel %vm752, 1, 0
    %v771 = vsel %vm753, 1, 0
    %v772 = vsel %vm754, 1, 0
    %v773 = vsel %vm755, 1, 0
    %v774 = vcvt.s32.f32 %v756
    %v775 = vcvt.s32.f32 %v757
    %v776 = vcvt.s32.f32 %v758
    %v777 = vcvt.s32.f32 %v759
    %v778 = vcvt.s32.f32 %v760
    %v779 = vcvt.s32.f32 %v761
    %v780 = vcvt.s32.f32 %v762
    %v781 = vcvt.s32.f32 %v763
    %v782 = vcvt.s32.f32 %v764
    %v783 = vcvt.s32.f32 %v765
    %v784 = vcvt.s32.f32 %v766
    %v785 = vcvt.s32.f32 %v767
    %v786 = vcvt.s32.f32 %v768
    %v787 = vcvt.s32.f32 %v769
    %v788 = vcvt.s32.f32 %v770
    %v789 = vcvt.s32.f32 %v771
    %v790 = vcvt.s32.f32 %v772
    %v791 = vcvt.s32.f32 %v773
    %vm792 = vcmask 130048
    %v794 = vsel %vm792, %v661, 0
    %v797 = vsel %vm792, %v663, 0
    %v800 = vsel %vm792, %v665, 0
    %v803 = vsel %vm792, %v667, 0
    %805 = vmatprep.subr.mxu0 0.0
    %806 = vmatpush1.msra.mxu0 %v719
    %807 = vmatprep.subr.mxu0 0.0
    %808 = vmatpush1.msra.mxu0 %v720
    %809 = vmatprep.subr.mxu0 0.0
    %810 = vmatpush1.msra.mxu0 %v721
    %811 = vmatprep.subr.mxu0 0.0
    %812 = vmatpush1.msra.mxu0 %v722
    %813 = vmatprep.subr.mxu0 0.0
    %814 = vmatpush1.msra.mxu0 %v723
    %815 = vmatprep.subr.mxu0 0.0
    %816 = vmatpush1.msra.mxu0 %v724
    %817 = vmatprep.subr.mxu0 0.0
    %818 = vmatpush1.msra.mxu0 %v725
    %819 = vmatprep.subr.mxu0 0.0
    %820 = vmatpush1.msra.mxu0 %v726
    %821 = vmatprep.subr.mxu0 0.0
    %822 = vmatpush1.msra.mxu0 %v727
    %823 = vmatprep.subr.mxu0 0.0
    %824 = vmatpush1.msra.mxu0 %v728
    %825 = vmatprep.subr.mxu0 0.0
    %826 = vmatpush1.msra.mxu0 %v729
    %827 = vmatprep.subr.mxu0 0.0
    %828 = vmatpush1.msra.mxu0 %v730
    %829 = vmatprep.subr.mxu0 0.0
    %830 = vmatpush1.msra.mxu0 %v731
    %831 = vmatprep.subr.mxu0 0.0
    %832 = vmatpush1.msra.mxu0 %v732
    %833 = vmatprep.subr.mxu0 0.0
    %834 = vmatpush1.msra.mxu0 %v733
    %835 = vmatprep.subr.mxu0 0.0
    %836 = vmatpush1.msra.mxu0 %v734
    %837 = vmatprep.subr.mxu0 0.0
    %838 = vmatpush1.msra.mxu0 %v735
    %839 = vmatprep.subr.mxu0 0.0
    %840 = vmatpush1.msra.mxu0 %v736
    %841 = vmatprep.subr.mxu0 0.0
    %842 = vmatpush1.msra.mxu0 0.0
    %843 = vmatprep.subr.mxu0 0.0
    %844 = vmatpush1.msra.mxu0 0.0
    %845 = vmatprep.subr.mxu0 0.0
    %846 = vmatpush1.msra.mxu0 0.0
    %847 = vmatprep.subr.mxu0 0.0
    %848 = vmatpush1.msra.mxu0 0.0
    %849 = vmatprep.subr.mxu0 0.0
    %850 = vmatpush1.msra.mxu0 0.0
    %851 = vmatprep.subr.mxu0 0.0
    %852 = vmatpush1.msra.mxu0 0.0
    %853 = vmatprep.subr.mxu0 0.0
    %854 = vmatpush1.msra.mxu0 0.0
    %855 = vmatprep.subr.mxu0 0.0
    %856 = vmatpush1.msra.mxu0 0.0
    %857 = vmatprep.subr.mxu0 0.0
    %858 = vmatpush1.msra.mxu0 0.0
    %859 = vmatprep.subr.mxu0 0.0
    %860 = vmatpush1.msra.mxu0 0.0
    %861 = vmatprep.subr.mxu0 0.0
    %862 = vmatpush1.msra.mxu0 0.0
    %863 = vmatprep.subr.mxu0 0.0
    %864 = vmatpush1.msra.mxu0 0.0
    %865 = vmatprep.subr.mxu0 0.0
    %866 = vmatpush1.msra.mxu0 0.0
    %867 = vmatprep.subr.mxu0 0.0
    %868 = vmatpush1.msra.mxu0 0.0
    %869 = vmatprep.mubr.f32.mxu0 %v794
    %870 = vmatmul.mubr.f32.gmra.mrb[0].mxu0 %v660
    %v871 = vpop.f32.mrb[0].mxu0
    %v872 = vadd.f32 0.0, %v871
    %v873 = vpop.f32.mrb[0].mxu0
    %874 = vmatprep.mubr.f32.mxu0 %v797
    %875 = vmatmul.mubr.f32.gmra.mrb[0].mxu0 %v662
    %v876 = vpop.f32.mrb[0].mxu0
    %v877 = vadd.f32 0.0, %v876
    %v878 = vpop.f32.mrb[0].mxu0
    %879 = vmatprep.mubr.f32.mxu0 %v800
    %880 = vmatmul.mubr.f32.gmra.mrb[0].mxu0 %v664
    %v881 = vpop.f32.mrb[0].mxu0
    %v882 = vadd.f32 0.0, %v881
    %v883 = vpop.f32.mrb[0].mxu0
    %884 = vmatprep.mubr.f32.mxu0 %v803
    %885 = vmatmul.mubr.f32.gmra.mrb[0].mxu0 %v666
    %v886 = vpop.f32.mrb[0].mxu0
    %v887 = vadd.f32 0.0, %v886
    %v888 = vpop.f32.mrb[0].mxu0
    %889 = vdwg.mxu0
    %890 = vmatprep.subr.mxu0 0.0
    %891 = vmatpush1.msra.mxu0 %v774
    %892 = vmatprep.subr.mxu0 0.0
    %893 = vmatpush1.msra.mxu0 %v775
    %894 = vmatprep.subr.mxu0 0.0
    %895 = vmatpush1.msra.mxu0 %v776
    %896 = vmatprep.subr.mxu0 0.0
    %897 = vmatpush1.msra.mxu0 %v777
    %898 = vmatprep.subr.mxu0 0.0
    %899 = vmatpush1.msra.mxu0 %v778
    %900 = vmatprep.subr.mxu0 0.0
    %901 = vmatpush1.msra.mxu0 %v779
    %902 = vmatprep.subr.mxu0 0.0
    %903 = vmatpush1.msra.mxu0 %v780
    %904 = vmatprep.subr.mxu0 0.0
    %905 = vmatpush1.msra.mxu0 %v781
    %906 = vmatprep.subr.mxu0 0.0
    %907 = vmatpush1.msra.mxu0 %v782
    %908 = vmatprep.subr.mxu0 0.0
    %909 = vmatpush1.msra.mxu0 %v783
    %910 = vmatprep.subr.mxu0 0.0
    %911 = vmatpush1.msra.mxu0 %v784
    %912 = vmatprep.subr.mxu0 0.0
    %913 = vmatpush1.msra.mxu0 %v785
    %914 = vmatprep.subr.mxu0 0.0
    %915 = vmatpush1.msra.mxu0 %v786
    %916 = vmatprep.subr.mxu0 0.0
    %917 = vmatpush1.msra.mxu0 %v787
    %918 = vmatprep.subr.mxu0 0.0
    %919 = vmatpush1.msra.mxu0 %v788
    %920 = vmatprep.subr.mxu0 0.0
    %921 = vmatpush1.msra.mxu0 %v789
    %922 = vmatprep.subr.mxu0 0.0
    %923 = vmatpush1.msra.mxu0 %v790
    %924 = vmatprep.subr.mxu0 0.0
    %925 = vmatpush1.msra.mxu0 %v791
    %926 = vmatprep.subr.mxu0 0.0
    %927 = vmatpush1.msra.mxu0 0.0
    %928 = vmatprep.subr.mxu0 0.0
    %929 = vmatpush1.msra.mxu0 0.0
    %930 = vmatprep.subr.mxu0 0.0
    %931 = vmatpush1.msra.mxu0 0.0
    %932 = vmatprep.subr.mxu0 0.0
    %933 = vmatpush1.msra.mxu0 0.0
    %934 = vmatprep.subr.mxu0 0.0
    %935 = vmatpush1.msra.mxu0 0.0
    %936 = vmatprep.subr.mxu0 0.0
    %937 = vmatpush1.msra.mxu0 0.0
    %938 = vmatprep.subr.mxu0 0.0
    %939 = vmatpush1.msra.mxu0 0.0
    %940 = vmatprep.subr.mxu0 0.0
    %941 = vmatpush1.msra.mxu0 0.0
    %942 = vmatprep.subr.mxu0 0.0
    %943 = vmatpush1.msra.mxu0 0.0
    %944 = vmatprep.subr.mxu0 0.0
    %945 = vmatpush1.msra.mxu0 0.0
    %946 = vmatprep.subr.mxu0 0.0
    %947 = vmatpush1.msra.mxu0 0.0
    %948 = vmatprep.subr.mxu0 0.0
    %949 = vmatpush1.msra.mxu0 0.0
    %950 = vmatprep.subr.mxu0 0.0
    %951 = vmatpush1.msra.mxu0 0.0
    %952 = vmatprep.subr.mxu0 0.0
    %953 = vmatpush1.msra.mxu0 0.0
    %954 = vmatprep.mubr.f32.mxu0 %v794
    %955 = vmatmul.mubr.f32.gmra.mrb[0].mxu0 %v660
    %v956 = vpop.f32.mrb[0].mxu0
    %v957 = vadd.f32 0.0, %v956
    %v958 = vpop.f32.mrb[0].mxu0
    %959 = vmatprep.mubr.f32.mxu0 %v797
    %960 = vmatmul.mubr.f32.gmra.mrb[0].mxu0 %v662
    %v961 = vpop.f32.mrb[0].mxu0
    %v962 = vadd.f32 0.0, %v961
    %v963 = vpop.f32.mrb[0].mxu0
    %964 = vmatprep.mubr.f32.mxu0 %v800
    %965 = vmatmul.mubr.f32.gmra.mrb[0].mxu0 %v664
    %v966 = vpop.f32.mrb[0].mxu0
    %v967 = vadd.f32 0.0, %v966
    %v968 = vpop.f32.mrb[0].mxu0
    %969 = vmatprep.mubr.f32.mxu0 %v803
    %970 = vmatmul.mubr.f32.gmra.mrb[0].mxu0 %v666
    %v971 = vpop.f32.mrb[0].mxu0
    %v972 = vadd.f32 0.0, %v971
    %v973 = vpop.f32.mrb[0].mxu0
    %974 = vdwg.mxu0
    %v975 = vmax.f32 %v872, %v957
    %v976 = vmax.f32 %v877, %v962
    %v977 = vmax.f32 %v882, %v967
    %v978 = vmax.f32 %v887, %v972
    %vm984 = vcmask 1046528
    %v985 = vrot.slane %v975, 1
    %v986 = vrot.slane %v976, 1
    %v987 = vsel %vm984, %v985, %v986
    %v988 = vrot.slane %v977, 1
    %v989 = vsel %vm984, %v986, %v988
    %v990 = vrot.slane %v978, 1
    %v991 = vsel %vm984, %v988, %v990
    %v992 = vrot.slane 0.0, 1
    %v993 = vsel %vm984, %v990, %v992
    %994 = vrot.lane.b32.xlu0 %v987, 72
    %v995 = vpop.permute.xlu0 %994
    %996 = vrot.lane.b32.xlu0 %v989, 72
    %v997 = vpop.permute.xlu0 %996
    %998 = vrot.lane.b32.xlu0 %v991, 72
    %v999 = vpop.permute.xlu0 %998
    %1000 = vrot.lane.b32.xlu0 %v993, 72
    %v1001 = vpop.permute.xlu0 %1000
    %vm1006 = vcmask 1045504
    %v1007 = vrot.slane %v975, 2
    %v1008 = vrot.slane %v976, 2
    %v1009 = vsel %vm1006, %v1007, %v1008
    %v1010 = vrot.slane %v977, 2
    %v1011 = vsel %vm1006, %v1008, %v1010
    %v1012 = vrot.slane %v978, 2
    %v1013 = vsel %vm1006, %v1010, %v1012
    %v1014 = vrot.slane 0.0, 2
    %v1015 = vsel %vm1006, %v1012, %v1014
    %1016 = vrot.lane.b32.xlu0 %v1009, 16
    %v1017 = vpop.permute.xlu0 %1016
    %1018 = vrot.lane.b32.xlu0 %v1011, 16
    %v1019 = vpop.permute.xlu0 %1018
    %1020 = vrot.lane.b32.xlu0 %v1013, 16
    %v1021 = vpop.permute.xlu0 %1020
    %1022 = vrot.lane.b32.xlu0 %v1015, 16
    %v1023 = vpop.permute.xlu0 %1022
    %vm1028 = vcmask 1044480
    %v1029 = vrot.slane %v975, 3
    %v1030 = vrot.slane %v976, 3
    %v1031 = vsel %vm1028, %v1029, %v1030
    %v1032 = vrot.slane %v977, 3
    %v1033 = vsel %vm1028, %v1030, %v1032
    %v1034 = vrot.slane %v978, 3
    %v1035 = vsel %vm1028, %v1032, %v1034
    %v1036 = vrot.slane 0.0, 3
    %v1037 = vsel %vm1028, %v1034, %v1036
    %1038 = vrot.lane.b32.xlu0 %v1031, 88
    %v1039 = vpop.permute.xlu0 %1038
    %1040 = vrot.lane.b32.xlu0 %v1033, 88
    %v1041 = vpop.permute.xlu0 %1040
    %1042 = vrot.lane.b32.xlu0 %v1035, 88
    %v1043 = vpop.permute.xlu0 %1042
    %1044 = vrot.lane.b32.xlu0 %v1037, 88
    %v1045 = vpop.permute.xlu0 %1044
    %v1050 = vrot.slane %v975, 4
    %v1051 = vrot.slane %v976, 4
    %v1052 = vsel %vm282, %v1050, %v1051
    %v1053 = vrot.slane %v977, 4
    %v1054 = vsel %vm282, %v1051, %v1053
    %v1055 = vrot.slane %v978, 4
    %v1056 = vsel %vm282, %v1053, %v1055
    %v1057 = vrot.slane 0.0, 4
    %v1058 = vsel %vm282, %v1055, %v1057
    %1059 = vrot.lane.b32.xlu0 %v1052, 32
    %v1060 = vpop.permute.xlu0 %1059
    %1061 = vrot.lane.b32.xlu0 %v1054, 32
    %v1062 = vpop.permute.xlu0 %1061
    %1063 = vrot.lane.b32.xlu0 %v1056, 32
    %v1064 = vpop.permute.xlu0 %1063
    %1065 = vrot.lane.b32.xlu0 %v1058, 32
    %v1066 = vpop.permute.xlu0 %1065
    %vm1071 = vcmask 588800
    %v1072 = vsel %vm1071, %v975, %v995
    %v1073 = vsel %vm1071, %v976, %v997
    %v1074 = vsel %vm1071, %v977, %v999
    %v1075 = vsel %vm1071, %v978, %v1001
    %v1076 = vsel %vm792, %v995, %v1017
    %v1077 = vsel %vm792, %v997, %v1019
    %v1078 = vsel %vm792, %v999, %v1021
    %v1079 = vsel %vm792, %v1001, %v1023
    %vm1080 = vcmask 719872
    %v1081 = vsel %vm1080, %v1076, %v1039
    %v1082 = vsel %vm1080, %v1077, %v1041
    %v1083 = vsel %vm1080, %v1078, %v1043
    %v1084 = vsel %vm1080, %v1079, %v1045
    %vm1085 = vcmask 261120
    %v1086 = vsel %vm1085, %v1039, %v1060
    %v1087 = vsel %vm1085, %v1041, %v1062
    %v1088 = vsel %vm1085, %v1043, %v1064
    %v1089 = vsel %vm1085, %v1045, %v1066
    %v1090 = vld [vmem:[%s1 + $0x120] sm:$0xff]
    %v1091 = vld [vmem:[%s1 + $0x130] sm:$0xff]
    %v1092 = vld [vmem:[%s1 + $0x140] sm:$0xff]
    %v1093 = vld [vmem:[%s1 + $0x150] sm:$0xff]
    %v1094 = vld [vmem:[%s1 + $0x160] sm:$0xff]
    %v1095 = vld [vmem:[%s1 + $0x170] sm:$0xff]
    %v1096 = vld [vmem:[%s1 + $0x180] sm:$0xff]
    %v1097 = vld [vmem:[%s1 + $0x190] sm:$0xff]
    %v1098 = vld [vmem:[%s1 + $0x1a0] sm:$0xff]
    %v1099 = vld [vmem:[%s1 + $0x1b0] sm:$0xff]
    %v1100 = vld [vmem:[%s1 + $0x1c0] sm:$0xff]
    %v1101 = vld [vmem:[%s1 + $0x1d0] sm:$0xff]
    %v1102 = vld [vmem:[%s1 + $0x1e0] sm:$0xff]
    %v1103 = vld [vmem:[%s1 + $0x1f0] sm:$0xff]
    %v1104 = vld [vmem:[%s1 + $0x200] sm:$0xff]
    %v1105 = vld [vmem:[%s1 + $0x210] sm:$0xff]
    %v1106 = vld [vmem:[%s1 + $0x220] sm:$0xff]
    %v1107 = vld [vmem:[%s1 + $0x230] sm:$0xff]
    %v1108 = vld [vmem:[%s1 + $0x240] sm:$0xff]
    %v1109 = vld [vmem:[%s1 + $0x250] sm:$0xff]
    %v1110 = vld [vmem:[%s1 + $0x260] sm:$0xff]
    %v1111 = vld [vmem:[%s1 + $0x270] sm:$0xff]
    %v1112 = vld [vmem:[%s1 + $0x280] sm:$0xff]
    %v1113 = vld [vmem:[%s1 + $0x290] sm:$0xff]
    %v1114 = vld [vmem:[%s1 + $0x2a0] sm:$0xff]
    %v1115 = vld [vmem:[%s1 + $0x2b0] sm:$0xff]
    %v1116 = vld [vmem:[%s1 + $0x2c0] sm:$0xff]
    %v1117 = vld [vmem:[%s1 + $0x2d0] sm:$0xff]
    %v1118 = vld [vmem:[%s1 + $0x2e0] sm:$0xff]
    %v1119 = vld [vmem:[%s1 + $0x2f0] sm:$0xff]
    %v1120 = vld [vmem:[%s1 + $0x300] sm:$0xff]
    %v1121 = vld [vmem:[%s1 + $0x310] sm:$0xff]
    %v1122 = vld [vmem:[%s1 + $0x320] sm:$0xff]
    %v1123 = vld [vmem:[%s1 + $0x330] sm:$0xff]
    %v1124 = vld [vmem:[%s1 + $0x340] sm:$0xff]
    %v1125 = vld [vmem:[%s1 + $0x350] sm:$0xff]
    %v1126 = vld [vmem:[%s1 + $0x360] sm:$0xff]
    %v1127 = vld [vmem:[%s1 + $0x370] sm:$0xff]
    %v1128 = vld [vmem:[%s1 + $0x380] sm:$0xff]
    %v1129 = vld [vmem:[%s1 + $0x390] sm:$0xff]
    %v1130 = vld [vmem:[%s1 + $0x3a0] sm:$0xff]
    %v1131 = vld [vmem:[%s1 + $0x3b0] sm:$0xff]
    %v1132 = vld [vmem:[%s1 + $0x3c0] sm:$0xff]
    %v1133 = vld [vmem:[%s1 + $0x3d0] sm:$0xff]
    %v1134 = vld [vmem:[%s1 + $0x3e0] sm:$0xff]
    %v1135 = vld [vmem:[%s1 + $0x6e1] ss:$0 sm:$0xff]
    %vm1136 = vcmask 850944
    %v1138 = vsel %vm1136, %v1086, 0
    %v1141 = vsel %vm1136, %v1087, 0
    %v1144 = vsel %vm1136, %v1088, 0
    %v1147 = vsel %vm1136, %v1089, 0
    %1149 = vmatprep.subr.mxu0 0.0
    %1150 = vmatpush1.msra.mxu0 %v1090
    %1151 = vmatprep.subr.mxu0 0.0
    %1152 = vmatpush1.msra.mxu0 %v1091
    %1153 = vmatprep.subr.mxu0 0.0
    %1154 = vmatpush1.msra.mxu0 %v1092
    %1155 = vmatprep.subr.mxu0 0.0
    %1156 = vmatpush1.msra.mxu0 %v1093
    %1157 = vmatprep.subr.mxu0 0.0
    %1158 = vmatpush1.msra.mxu0 %v1094
    %1159 = vmatprep.subr.mxu0 0.0
    %1160 = vmatpush1.msra.mxu0 %v1095
    %1161 = vmatprep.subr.mxu0 0.0
    %1162 = vmatpush1.msra.mxu0 %v1096
    %1163 = vmatprep.subr.mxu0 0.0
    %1164 = vmatpush1.msra.mxu0 %v1097
    %1165 = vmatprep.subr.mxu0 0.0
    %1166 = vmatpush1.msra.mxu0 %v1098
    %1167 = vmatprep.subr.mxu0 0.0
    %1168 = vmatpush1.msra.mxu0 %v1099
    %1169 = vmatprep.subr.mxu0 0.0
    %1170 = vmatpush1.msra.mxu0 %v1100
    %1171 = vmatprep.subr.mxu0 0.0
    %1172 = vmatpush1.msra.mxu0 %v1101
    %1173 = vmatprep.subr.mxu0 0.0
    %1174 = vmatpush1.msra.mxu0 %v1102
    %1175 = vmatprep.subr.mxu0 0.0
    %1176 = vmatpush1.msra.mxu0 %v1103
    %1177 = vmatprep.subr.mxu0 0.0
    %1178 = vmatpush1.msra.mxu0 %v1104
    %1179 = vmatprep.subr.mxu0 0.0
    %1180 = vmatpush1.msra.mxu0 %v1105
    %1181 = vmatprep.subr.mxu0 0.0
    %1182 = vmatpush1.msra.mxu0 %v1106
    %1183 = vmatprep.subr.mxu0 0.0
    %1184 = vmatpush1.msra.mxu0 %v1107
    %1185 = vmatprep.subr.mxu0 0.0
    %1186 = vmatpush1.msra.mxu0 %v1108
    %1187 = vmatprep.subr.mxu0 0.0
    %1188 = vmatpush1.msra.mxu0 %v1109
    %1189 = vmatprep.subr.mxu0 0.0
    %1190 = vmatpush1.msra.mxu0 %v1110
    %1191 = vmatprep.subr.mxu0 0.0
    %1192 = vmatpush1.msra.mxu0 %v1111
    %1193 = vmatprep.subr.mxu0 0.0
    %1194 = vmatpush1.msra.mxu0 %v1112
    %1195 = vmatprep.subr.mxu0 0.0
    %1196 = vmatpush1.msra.mxu0 %v1113
    %1197 = vmatprep.subr.mxu0 0.0
    %1198 = vmatpush1.msra.mxu0 %v1114
    %1199 = vmatprep.subr.mxu0 0.0
    %1200 = vmatpush1.msra.mxu0 %v1115
    %1201 = vmatprep.subr.mxu0 0.0
    %1202 = vmatpush1.msra.mxu0 %v1116
    %1203 = vmatprep.subr.mxu0 0.0
    %1204 = vmatpush1.msra.mxu0 %v1117
    %1205 = vmatprep.subr.mxu0 0.0
    %1206 = vmatpush1.msra.mxu0 %v1118
    %1207 = vmatprep.subr.mxu0 0.0
    %1208 = vmatpush1.msra.mxu0 %v1119
    %1209 = vmatprep.subr.mxu0 0.0
    %1210 = vmatpush1.msra.mxu0 %v1120
    %1211 = vmatprep.subr.mxu0 0.0
    %1212 = vmatpush1.msra.mxu0 %v1121
    %1213 = vmatprep.mubr.f32.mxu0 %v1081
    %1214 = vmatmul.mubr.f32.gmra.mrb[0].mxu0 %v1072
    %v1215 = vpop.f32.mrb[0].mxu0
    %v1216 = vadd.f32 %v1135, %v1215
    %v1217 = vpop.f32.mrb[0].mxu0
    %1218 = vmatprep.mubr.f32.mxu0 %v1082
    %1219 = vmatmul.mubr.f32.gmra.mrb[0].mxu0 %v1073
    %v1220 = vpop.f32.mrb[0].mxu0
    %v1221 = vadd.f32 %v1135, %v1220
    %v1222 = vpop.f32.mrb[0].mxu0
    %1223 = vmatprep.mubr.f32.mxu0 %v1083
    %1224 = vmatmul.mubr.f32.gmra.mrb[0].mxu0 %v1074
    %v1225 = vpop.f32.mrb[0].mxu0
    %v1226 = vadd.f32 %v1135, %v1225
    %v1227 = vpop.f32.mrb[0].mxu0
    %1228 = vmatprep.mubr.f32.mxu0 %v1084
    %1229 = vmatmul.mubr.f32.gmra.mrb[0].mxu0 %v1075
    %v1230 = vpop.f32.mrb[0].mxu0
    %v1231 = vadd.f32 %v1135, %v1230
    %v1232 = vpop.f32.mrb[0].mxu0
    %1233 = vdwg.mxu0
    %1234 = vmatprep.subr.mxu0 0.0
    %1235 = vmatpush1.msra.mxu0 %v1122
    %1236 = vmatprep.subr.mxu0 0.0
    %1237 = vmatpush1.msra.mxu0 %v1123
    %1238 = vmatprep.subr.mxu0 0.0
    %1239 = vmatpush1.msra.mxu0 %v1124
    %1240 = vmatprep.subr.mxu0 0.0
    %1241 = vmatpush1.msra.mxu0 %v1125
    %1242 = vmatprep.subr.mxu0 0.0
    %1243 = vmatpush1.msra.mxu0 %v1126
    %1244 = vmatprep.subr.mxu0 0.0
    %1245 = vmatpush1.msra.mxu0 %v1127
    %1246 = vmatprep.subr.mxu0 0.0
    %1247 = vmatpush1.msra.mxu0 %v1128
    %1248 = vmatprep.subr.mxu0 0.0
    %1249 = vmatpush1.msra.mxu0 %v1129
    %1250 = vmatprep.subr.mxu0 0.0
    %1251 = vmatpush1.msra.mxu0 %v1130
    %1252 = vmatprep.subr.mxu0 0.0
    %1253 = vmatpush1.msra.mxu0 %v1131
    %1254 = vmatprep.subr.mxu0 0.0
    %1255 = vmatpush1.msra.mxu0 %v1132
    %1256 = vmatprep.subr.mxu0 0.0
    %1257 = vmatpush1.msra.mxu0 %v1133
    %1258 = vmatprep.subr.mxu0 0.0
    %1259 = vmatpush1.msra.mxu0 %v1134
    %1260 = vmatprep.subr.mxu0 0.0
    %1261 = vmatpush1.msra.mxu0 0.0
    %1262 = vmatprep.subr.mxu0 0.0
    %1263 = vmatpush1.msra.mxu0 0.0
    %1264 = vmatprep.subr.mxu0 0.0
    %1265 = vmatpush1.msra.mxu0 0.0
    %1266 = vmatprep.subr.mxu0 0.0
    %1267 = vmatpush1.msra.mxu0 0.0
    %1268 = vmatprep.subr.mxu0 0.0
    %1269 = vmatpush1.msra.mxu0 0.0
    %1270 = vmatprep.subr.mxu0 0.0
    %1271 = vmatpush1.msra.mxu0 0.0
    %1272 = vmatprep.subr.mxu0 0.0
    %1273 = vmatpush1.msra.mxu0 0.0
    %1274 = vmatprep.subr.mxu0 0.0
    %1275 = vmatpush1.msra.mxu0 0.0
    %1276 = vmatprep.subr.mxu0 0.0
    %1277 = vmatpush1.msra.mxu0 0.0
    %1278 = vmatprep.subr.mxu0 0.0
    %1279 = vmatpush1.msra.mxu0 0.0
    %1280 = vmatprep.subr.mxu0 0.0
    %1281 = vmatpush1.msra.mxu0 0.0
    %1282 = vmatprep.subr.mxu0 0.0
    %1283 = vmatpush1.msra.mxu0 0.0
    %1284 = vmatprep.subr.mxu0 0.0
    %1285 = vmatpush1.msra.mxu0 0.0
    %1286 = vmatprep.subr.mxu0 0.0
    %1287 = vmatpush1.msra.mxu0 0.0
    %1288 = vmatprep.subr.mxu0 0.0
    %1289 = vmatpush1.msra.mxu0 0.0
    %1290 = vmatprep.subr.mxu0 0.0
    %1291 = vmatpush1.msra.mxu0 0.0
    %1292 = vmatprep.subr.mxu0 0.0
    %1293 = vmatpush1.msra.mxu0 0.0
    %1294 = vmatprep.subr.mxu0 0.0
    %1295 = vmatpush1.msra.mxu0 0.0
    %1296 = vmatprep.subr.mxu0 0.0
    %1297 = vmatpush1.msra.mxu0 0.0
    %1298 = vmatprep.mubr.f32.mxu0 0.0
    %1299 = vmatmul.mubr.f32.gmra.mrb[0].mxu0 %v1138
    %v1300 = vpop.f32.mrb[0].mxu0
    %v1301 = vadd.f32 %v1216, %v1300
    %v1302 = vpop.f32.mrb[0].mxu0
    %1303 = vmatprep.mubr.f32.mxu0 0.0
    %1304 = vmatmul.mubr.f32.gmra.mrb[0].mxu0 %v1141
    %v1305 = vpop.f32.mrb[0].mxu0
    %v1306 = vadd.f32 %v1221, %v1305
    %v1307 = vpop.f32.mrb[0].mxu0
    %1308 = vmatprep.mubr.f32.mxu0 0.0
    %1309 = vmatmul.mubr.f32.gmra.mrb[0].mxu0 %v1144
    %v1310 = vpop.f32.mrb[0].mxu0
    %v1311 = vadd.f32 %v1226, %v1310
    %v1312 = vpop.f32.mrb[0].mxu0
    %1313 = vmatprep.mubr.f32.mxu0 0.0
    %1314 = vmatmul.mubr.f32.gmra.mrb[0].mxu0 %v1147
    %v1315 = vpop.f32.mrb[0].mxu0
    %v1316 = vadd.f32 %v1231, %v1315
    %v1317 = vpop.f32.mrb[0].mxu0
    %1318 = vdwg.mxu0
    %v1319 = vmax.f32 %v1301, 0.0
    %v1320 = vmax.f32 %v1306, 0.0
    %v1321 = vmax.f32 %v1311, 0.0
    %v1322 = vmax.f32 %v1316, 0.0
    %v1323 = vsel %vm1085, %v437, 0
    %v1325 = vsel %vm1085, %v438, 0
    %1327 = vmatprep.subr.mxu0 0.0
    %1328 = vmatpush1.msra.mxu0 %v1319
    %1329 = vmatprep.subr.mxu0 0.0
    %1330 = vmatpush1.msra.mxu0 %v1320
    %1331 = vmatprep.subr.mxu0 0.0
    %1332 = vmatpush1.msra.mxu0 %v1321
    %1333 = vmatprep.subr.mxu0 0.0
    %1334 = vmatpush1.msra.mxu0 %v1322
    %1335 = vmatprep.subr.mxu0 0.0
    %1336 = vmatpush1.msra.mxu0 0.0
    %1337 = vmatprep.subr.mxu0 0.0
    %1338 = vmatpush1.msra.mxu0 0.0
    %1339 = vmatprep.subr.mxu0 0.0
    %1340 = vmatpush1.msra.mxu0 0.0
    %1341 = vmatprep.subr.mxu0 0.0
    %1342 = vmatpush1.msra.mxu0 0.0
    %1343 = vmatprep.subr.mxu0 0.0
    %1344 = vmatpush1.msra.mxu0 0.0
    %1345 = vmatprep.subr.mxu0 0.0
    %1346 = vmatpush1.msra.mxu0 0.0
    %1347 = vmatprep.subr.mxu0 0.0
    %1348 = vmatpush1.msra.mxu0 0.0
    %1349 = vmatprep.subr.mxu0 0.0
    %1350 = vmatpush1.msra.mxu0 0.0
    %1351 = vmatprep.subr.mxu0 0.0
    %1352 = vmatpush1.msra.mxu0 0.0
    %1353 = vmatprep.subr.mxu0 0.0
    %1354 = vmatpush1.msra.mxu0 0.0
    %1355 = vmatprep.subr.mxu0 0.0
    %1356 = vmatpush1.msra.mxu0 0.0
    %1357 = vmatprep.subr.mxu0 0.0
    %1358 = vmatpush1.msra.mxu0 0.0
    %1359 = vmatprep.subr.mxu0 0.0
    %1360 = vmatpush1.msra.mxu0 0.0
    %1361 = vmatprep.subr.mxu0 0.0
    %1362 = vmatpush1.msra.mxu0 0.0
    %1363 = vmatprep.subr.mxu0 0.0
    %1364 = vmatpush1.msra.mxu0 0.0
    %1365 = vmatprep.subr.mxu0 0.0
    %1366 = vmatpush1.msra.mxu0 0.0
    %1367 = vmatprep.subr.mxu0 0.0
    %1368 = vmatpush1.msra.mxu0 0.0
    %1369 = vmatprep.subr.mxu0 0.0
    %1370 = vmatpush1.msra.mxu0 0.0
    %1371 = vmatprep.subr.mxu0 0.0
    %1372 = vmatpush1.msra.mxu0 0.0
    %1373 = vmatprep.subr.mxu0 0.0
    %1374 = vmatpush1.msra.mxu0 0.0
    %1375 = vmatprep.subr.mxu0 0.0
    %1376 = vmatpush1.msra.mxu0 0.0
    %1377 = vmatprep.subr.mxu0 0.0
    %1378 = vmatpush1.msra.mxu0 0.0
    %1379 = vmatprep.subr.mxu0 0.0
    %1380 = vmatpush1.msra.mxu0 0.0
    %1381 = vmatprep.subr.mxu0 0.0
    %1382 = vmatpush1.msra.mxu0 0.0
    %1383 = vmatprep.subr.mxu0 0.0
    %1384 = vmatpush1.msra.mxu0 0.0
    %1385 = vmatprep.subr.mxu0 0.0
    %1386 = vmatpush1.msra.mxu0 0.0
    %1387 = vmatprep.subr.mxu0 0.0
    %1388 = vmatpush1.msra.mxu0 0.0
    %1389 = vmatprep.subr.mxu0 0.0
    %1390 = vmatpush1.msra.mxu0 0.0
    %1391 = vmatprep.mubr.f32.mxu0 0.0
    %1392 = vmatmul.mubr.f32.gmra.mrb[0].mxu0 %v1323
    %v1393 = vpop.f32.mrb[0].mxu0
    %v1394 = vadd.f32 0.0, %v1393
    %v1395 = vpop.f32.mrb[0].mxu0
    %1396 = vmatprep.mubr.f32.mxu0 0.0
    %1397 = vmatmul.mubr.f32.gmra.mrb[0].mxu0 %v1325
    %v1398 = vpop.f32.mrb[0].mxu0
    %v1399 = vadd.f32 0.0, %v1398
    %v1400 = vpop.f32.mrb[0].mxu0
    %1401 = vdwg.mxu0
    %v1402 = vsel %vm1085, %v453, 0
    %v1404 = vsel %vm1085, %v454, 0
    %1406 = vmatprep.subr.mxu0 0.0
    %1407 = vmatpush1.msra.mxu0 %v1319
    %1408 = vmatprep.subr.mxu0 0.0
    %1409 = vmatpush1.msra.mxu0 %v1320
    %1410 = vmatprep.subr.mxu0 0.0
    %1411 = vmatpush1.msra.mxu0 %v1321
    %1412 = vmatprep.subr.mxu0 0.0
    %1413 = vmatpush1.msra.mxu0 %v1322
    %1414 = vmatprep.subr.mxu0 0.0
    %1415 = vmatpush1.msra.mxu0 0.0
    %1416 = vmatprep.subr.mxu0 0.0
    %1417 = vmatpush1.msra.mxu0 0.0
    %1418 = vmatprep.subr.mxu0 0.0
    %1419 = vmatpush1.msra.mxu0 0.0
    %1420 = vmatprep.subr.mxu0 0.0
    %1421 = vmatpush1.msra.mxu0 0.0
    %1422 = vmatprep.subr.mxu0 0.0
    %1423 = vmatpush1.msra.mxu0 0.0
    %1424 = vmatprep.subr.mxu0 0.0
    %1425 = vmatpush1.msra.mxu0 0.0
    %1426 = vmatprep.subr.mxu0 0.0
    %1427 = vmatpush1.msra.mxu0 0.0
    %1428 = vmatprep.subr.mxu0 0.0
    %1429 = vmatpush1.msra.mxu0 0.0
    %1430 = vmatprep.subr.mxu0 0.0
    %1431 = vmatpush1.msra.mxu0 0.0
    %1432 = vmatprep.subr.mxu0 0.0
    %1433 = vmatpush1.msra.mxu0 0.0
    %1434 = vmatprep.subr.mxu0 0.0
    %1435 = vmatpush1.msra.mxu0 0.0
    %1436 = vmatprep.subr.mxu0 0.0
    %1437 = vmatpush1.msra.mxu0 0.0
    %1438 = vmatprep.subr.mxu0 0.0
    %1439 = vmatpush1.msra.mxu0 0.0
    %1440 = vmatprep.subr.mxu0 0.0
    %1441 = vmatpush1.msra.mxu0 0.0
    %1442 = vmatprep.subr.mxu0 0.0
    %1443 = vmatpush1.msra.mxu0 0.0
    %1444 = vmatprep.subr.mxu0 0.0
    %1445 = vmatpush1.msra.mxu0 0.0
    %1446 = vmatprep.subr.mxu0 0.0
    %1447 = vmatpush1.msra.mxu0 0.0
    %1448 = vmatprep.subr.mxu0 0.0
    %1449 = vmatpush1.msra.mxu0 0.0
    %1450 = vmatprep.subr.mxu0 0.0
    %1451 = vmatpush1.msra.mxu0 0.0
    %1452 = vmatprep.subr.mxu0 0.0
    %1453 = vmatpush1.msra.mxu0 0.0
    %1454 = vmatprep.subr.mxu0 0.0
    %1455 = vmatpush1.msra.mxu0 0.0
    %1456 = vmatprep.subr.mxu0 0.0
    %1457 = vmatpush1.msra.mxu0 0.0
    %1458 = vmatprep.subr.mxu0 0.0
    %1459 = vmatpush1.msra.mxu0 0.0
    %1460 = vmatprep.subr.mxu0 0.0
    %1461 = vmatpush1.msra.mxu0 0.0
    %1462 = vmatprep.subr.mxu0 0.0
    %1463 = vmatpush1.msra.mxu0 0.0
    %1464 = vmatprep.subr.mxu0 0.0
    %1465 = vmatpush1.msra.mxu0 0.0
    %1466 = vmatprep.subr.mxu0 0.0
    %1467 = vmatpush1.msra.mxu0 0.0
    %1468 = vmatprep.subr.mxu0 0.0
    %1469 = vmatpush1.msra.mxu0 0.0
    %1470 = vmatprep.mubr.f32.mxu0 0.0
    %1471 = vmatmul.mubr.f32.gmra.mrb[0].mxu0 %v1402
    %v1472 = vpop.f32.mrb[0].mxu0
    %v1473 = vadd.f32 0.0, %v1472
    %v1474 = vpop.f32.mrb[0].mxu0
    %1475 = vmatprep.mubr.f32.mxu0 0.0
    %1476 = vmatmul.mubr.f32.gmra.mrb[0].mxu0 %v1404
    %v1477 = vpop.f32.mrb[0].mxu0
    %v1478 = vadd.f32 0.0, %v1477
    %v1479 = vpop.f32.mrb[0].mxu0
    %1480 = vdwg.mxu0
    %v1481 = vmax.f32 %v1394, %v1473
    %v1482 = vmax.f32 %v1399, %v1478
    %1483 = vmatprep.subr.mxu0 0.0
    %1484 = vmatpush1.msra.mxu0 %v719
    %1485 = vmatprep.subr.mxu0 0.0
    %1486 = vmatpush1.msra.mxu0 %v720
    %1487 = vmatprep.subr.mxu0 0.0
    %1488 = vmatpush1.msra.mxu0 %v721
    %1489 = vmatprep.subr.mxu0 0.0
    %1490 = vmatpush1.msra.mxu0 %v722
    %1491 = vmatprep.subr.mxu0 0.0
    %1492 = vmatpush1.msra.mxu0 %v723
    %1493 = vmatprep.subr.mxu0 0.0
    %1494 = vmatpush1.msra.mxu0 %v724
    %1495 = vmatprep.subr.mxu0 0.0
    %1496 = vmatpush1.msra.mxu0 %v725
    %1497 = vmatprep.subr.mxu0 0.0
    %1498 = vmatpush1.msra.mxu0 %v726
    %1499 = vmatprep.subr.mxu0 0.0
    %1500 = vmatpush1.msra.mxu0 %v727
    %1501 = vmatprep.subr.mxu0 0.0
    %1502 = vmatpush1.msra.mxu0 %v728
    %1503 = vmatprep.subr.mxu0 0.0
    %1504 = vmatpush1.msra.mxu0 %v729
    %1505 = vmatprep.subr.mxu0 0.0
    %1506 = vmatpush1.msra.mxu0 %v730
    %1507 = vmatprep.subr.mxu0 0.0
    %1508 = vmatpush1.msra.mxu0 %v731
    %1509 = vmatprep.subr.mxu0 0.0
    %1510 = vmatpush1.msra.mxu0 %v732
    %1511 = vmatprep.subr.mxu0 0.0
    %1512 = vmatpush1.msra.mxu0 %v733
    %1513 = vmatprep.subr.mxu0 0.0
    %1514 = vmatpush1.msra.mxu0 %v734
    %1515 = vmatprep.subr.mxu0 0.0
    %1516 = vmatpush1.msra.mxu0 0.0
    %1517 = vmatprep.subr.mxu0 0.0
    %1518 = vmatpush1.msra.mxu0 0.0
    %1519 = vmatprep.subr.mxu0 0.0
    %1520 = vmatpush1.msra.mxu0 0.0
    %1521 = vmatprep.subr.mxu0 0.0
    %1522 = vmatpush1.msra.mxu0 0.0
    %1523 = vmatprep.subr.mxu0 0.0
    %1524 = vmatpush1.msra.mxu0 0.0
    %1525 = vmatprep.subr.mxu0 0.0
    %1526 = vmatpush1.msra.mxu0 0.0
    %1527 = vmatprep.subr.mxu0 0.0
    %1528 = vmatpush1.msra.mxu0 0.0
    %1529 = vmatprep.subr.mxu0 0.0
    %1530 = vmatpush1.msra.mxu0 0.0
    %1531 = vmatprep.subr.mxu0 0.0
    %1532 = vmatpush1.msra.mxu0 0.0
    %1533 = vmatprep.subr.mxu0 0.0
    %1534 = vmatpush1.msra.mxu0 0.0
    %1535 = vmatprep.subr.mxu0 0.0
    %1536 = vmatpush1.msra.mxu0 0.0
    %1537 = vmatprep.subr.mxu0 0.0
    %1538 = vmatpush1.msra.mxu0 0.0
    %1539 = vmatprep.subr.mxu0 0.0
    %1540 = vmatpush1.msra.mxu0 0.0
    %1541 = vmatprep.subr.mxu0 0.0
    %1542 = vmatpush1.msra.mxu0 0.0
    %1543 = vmatprep.subr.mxu0 0.0
    %1544 = vmatpush1.msra.mxu0 0.0
    %1545 = vmatprep.subr.mxu0 0.0
    %1546 = vmatpush1.msra.mxu0 0.0
    %1547 = vmatprep.mubr.f32.mxu0 0.0
    %1548 = vmatmul.mubr.f32.gmra.mrb[0].mxu0 %v1481
    %v1549 = vpop.f32.mrb[0].mxu0
    %v1550 = vadd.f32 0.0, %v1549
    %v1551 = vpop.f32.mrb[0].mxu0
    %1552 = vmatprep.mubr.f32.mxu0 0.0
    %1553 = vmatmul.mubr.f32.gmra.mrb[0].mxu0 %v1482
    %v1554 = vpop.f32.mrb[0].mxu0
    %v1555 = vadd.f32 0.0, %v1554
    %v1556 = vpop.f32.mrb[0].mxu0
    %1557 = vdwg.mxu0
    %1558 = vmatprep.subr.mxu0 0.0
    %1559 = vmatpush1.msra.mxu0 %v774
    %1560 = vmatprep.subr.mxu0 0.0
    %1561 = vmatpush1.msra.mxu0 %v775
    %1562 = vmatprep.subr.mxu0 0.0
    %1563 = vmatpush1.msra.mxu0 %v776
    %1564 = vmatprep.subr.mxu0 0.0
    %1565 = vmatpush1.msra.mxu0 %v777
    %1566 = vmatprep.subr.mxu0 0.0
    %1567 = vmatpush1.msra.mxu0 %v778
    %1568 = vmatprep.subr.mxu0 0.0
    %1569 = vmatpush1.msra.mxu0 %v779
    %1570 = vmatprep.subr.mxu0 0.0
    %1571 = vmatpush1.msra.mxu0 %v780
    %1572 = vmatprep.subr.mxu0 0.0
    %1573 = vmatpush1.msra.mxu0 %v781
    %1574 = vmatprep.subr.mxu0 0.0
    %1575 = vmatpush1.msra.mxu0 %v782
    %1576 = vmatprep.subr.mxu0 0.0
    %1577 = vmatpush1.msra.mxu0 %v783
    %1578 = vmatprep.subr.mxu0 0.0
    %1579 = vmatpush1.msra.mxu0 %v784
    %1580 = vmatprep.subr.mxu0 0.0
    %1581 = vmatpush1.msra.mxu0 %v785
    %1582 = vmatprep.subr.mxu0 0.0
    %1583 = vmatpush1.msra.mxu0 %v786
    %1584 = vmatprep.subr.mxu0 0.0
    %1585 = vmatpush1.msra.mxu0 %v787
    %1586 = vmatprep.subr.mxu0 0.0
    %1587 = vmatpush1.msra.mxu0 %v788
    %1588 = vmatprep.subr.mxu0 0.0
    %1589 = vmatpush1.msra.mxu0 %v789
    %1590 = vmatprep.subr.mxu0 0.0
    %1591 = vmatpush1.msra.mxu0 0.0
    %1592 = vmatprep.subr.mxu0 0.0
    %1593 = vmatpush1.msra.mxu0 0.0
    %1594 = vmatprep.subr.mxu0 0.0
    %1595 = vmatpush1.msra.mxu0 0.0
    %1596 = vmatprep.subr.mxu0 0.0
    %1597 = vmatpush1.msra.mxu0 0.0
    %1598 = vmatprep.subr.mxu0 0.0
    %1599 = vmatpush1.msra.mxu0 0.0
    %1600 = vmatprep.subr.mxu0 0.0
    %1601 = vmatpush1.msra.mxu0 0.0
    %1602 = vmatprep.subr.mxu0 0.0
    %1603 = vmatpush1.msra.mxu0 0.0
    %1604 = vmatprep.subr.mxu0 0.0
    %1605 = vmatpush1.msra.mxu0 0.0
    %1606 = vmatprep.subr.mxu0 0.0
    %1607 = vmatpush1.msra.mxu0 0.0
    %1608 = vmatprep.subr.mxu0 0.0
    %1609 = vmatpush1.msra.mxu0 0.0
    %1610 = vmatprep.subr.mxu0 0.0
    %1611 = vmatpush1.msra.mxu0 0.0
    %1612 = vmatprep.subr.mxu0 0.0
    %1613 = vmatpush1.msra.mxu0 0.0
    %1614 = vmatprep.subr.mxu0 0.0
    %1615 = vmatpush1.msra.mxu0 0.0
    %1616 = vmatprep.subr.mxu0 0.0
    %1617 = vmatpush1.msra.mxu0 0.0
    %1618 = vmatprep.subr.mxu0 0.0
    %1619 = vmatpush1.msra.mxu0 0.0
    %1620 = vmatprep.subr.mxu0 0.0
    %1621 = vmatpush1.msra.mxu0 0.0
    %1622 = vmatprep.mubr.f32.mxu0 0.0
    %1623 = vmatmul.mubr.f32.gmra.mrb[0].mxu0 %v1481
    %v1624 = vpop.f32.mrb[0].mxu0
    %v1625 = vadd.f32 0.0, %v1624
    %v1626 = vpop.f32.mrb[0].mxu0
    %1627 = vmatprep.mubr.f32.mxu0 0.0
    %1628 = vmatmul.mubr.f32.gmra.mrb[0].mxu0 %v1482
    %v1629 = vpop.f32.mrb[0].mxu0
    %v1630 = vadd.f32 0.0, %v1629
    %v1631 = vpop.f32.mrb[0].mxu0
    %1632 = vdwg.mxu0
    %v1633 = vmax.f32 %v1550, %v1625
    %v1634 = vmax.f32 %v1555, %v1630
    %v1635 = vmul.u32 %v419, 8
    %vm1636 = vcmp.eq.s32.totalorder %v424, %v1635
    %v1637 = vsel %vm1636, 1, 0
    %v1638 = vcvt.s32.f32 %v1637
    %v1640 = vsel %vm792, %v1638, 0
    %1642 = vmatprep.subr.mxu0 0.0
    %1643 = vmatpush1.msra.mxu0 %v1633
    %1644 = vmatprep.subr.mxu0 0.0
    %1645 = vmatpush1.msra.mxu0 %v1634
    %1646 = vmatprep.subr.mxu0 0.0
    %1647 = vmatpush1.msra.mxu0 0.0
    %1648 = vmatprep.subr.mxu0 0.0
    %1649 = vmatpush1.msra.mxu0 0.0
    %1650 = vmatprep.subr.mxu0 0.0
    %1651 = vmatpush1.msra.mxu0 0.0
    %1652 = vmatprep.subr.mxu0 0.0
    %1653 = vmatpush1.msra.mxu0 0.0
    %1654 = vmatprep.subr.mxu0 0.0
    %1655 = vmatpush1.msra.mxu0 0.0
    %1656 = vmatprep.subr.mxu0 0.0
    %1657 = vmatpush1.msra.mxu0 0.0
    %1658 = vmatprep.subr.mxu0 0.0
    %1659 = vmatpush1.msra.mxu0 0.0
    %1660 = vmatprep.subr.mxu0 0.0
    %1661 = vmatpush1.msra.mxu0 0.0
    %1662 = vmatprep.subr.mxu0 0.0
    %1663 = vmatpush1.msra.mxu0 0.0
    %1664 = vmatprep.subr.mxu0 0.0
    %1665 = vmatpush1.msra.mxu0 0.0
    %1666 = vmatprep.subr.mxu0 0.0
    %1667 = vmatpush1.msra.mxu0 0.0
    %1668 = vmatprep.subr.mxu0 0.0
    %1669 = vmatpush1.msra.mxu0 0.0
    %1670 = vmatprep.subr.mxu0 0.0
    %1671 = vmatpush1.msra.mxu0 0.0
    %1672 = vmatprep.subr.mxu0 0.0
    %1673 = vmatpush1.msra.mxu0 0.0
    %1674 = vmatprep.subr.mxu0 0.0
    %1675 = vmatpush1.msra.mxu0 0.0
    %1676 = vmatprep.subr.mxu0 0.0
    %1677 = vmatpush1.msra.mxu0 0.0
    %1678 = vmatprep.subr.mxu0 0.0
    %1679 = vmatpush1.msra.mxu0 0.0
    %1680 = vmatprep.subr.mxu0 0.0
    %1681 = vmatpush1.msra.mxu0 0.0
    %1682 = vmatprep.subr.mxu0 0.0
    %1683 = vmatpush1.msra.mxu0 0.0
    %1684 = vmatprep.subr.mxu0 0.0
    %1685 = vmatpush1.msra.mxu0 0.0
    %1686 = vmatprep.subr.mxu0 0.0
    %1687 = vmatpush1.msra.mxu0 0.0
    %1688 = vmatprep.subr.mxu0 0.0
    %1689 = vmatpush1.msra.mxu0 0.0
    %1690 = vmatprep.subr.mxu0 0.0
    %1691 = vmatpush1.msra.mxu0 0.0
    %1692 = vmatprep.subr.mxu0 0.0
    %1693 = vmatpush1.msra.mxu0 0.0
    %1694 = vmatprep.subr.mxu0 0.0
    %1695 = vmatpush1.msra.mxu0 0.0
    %1696 = vmatprep.subr.mxu0 0.0
    %1697 = vmatpush1.msra.mxu0 0.0
    %1698 = vmatprep.subr.mxu0 0.0
    %1699 = vmatpush1.msra.mxu0 0.0
    %1700 = vmatprep.subr.mxu0 0.0
    %1701 = vmatpush1.msra.mxu0 0.0
    %1702 = vmatprep.subr.mxu0 0.0
    %1703 = vmatpush1.msra.mxu0 0.0
    %1704 = vmatprep.subr.mxu0 0.0
    %1705 = vmatpush1.msra.mxu0 0.0
    %1706 = vmatprep.mubr.f32.mxu0 0.0
    %1707 = vmatmul.mubr.f32.gmra.mrb[0].mxu0 %v1640
    %v1708 = vpop.f32.mrb[0].mxu0
    %v1709 = vadd.f32 0.0, %v1708
    %v1710 = vpop.f32.mrb[0].mxu0
    %1711 = vdwg.mxu0
    %v1712 = vadd.s32 %v1635, 1
    %vm1713 = vcmp.eq.s32.totalorder %v424, %v1712
    %v1714 = vsel %vm1713, 1, 0
    %v1715 = vcvt.s32.f32 %v1714
    %v1717 = vsel %vm792, %v1715, 0
    %1719 = vmatprep.subr.mxu0 0.0
    %1720 = vmatpush1.msra.mxu0 %v1633
    %1721 = vmatprep.subr.mxu0 0.0
    %1722 = vmatpush1.msra.mxu0 %v1634
    %1723 = vmatprep.subr.mxu0 0.0
    %1724 = vmatpush1.msra.mxu0 0.0
    %1725 = vmatprep.subr.mxu0 0.0
    %1726 = vmatpush1.msra.mxu0 0.0
    %1727 = vmatprep.subr.mxu0 0.0
    %1728 = vmatpush1.msra.mxu0 0.0
    %1729 = vmatprep.subr.mxu0 0.0
    %1730 = vmatpush1.msra.mxu0 0.0
    %1731 = vmatprep.subr.mxu0 0.0
    %1732 = vmatpush1.msra.mxu0 0.0
    %1733 = vmatprep.subr.mxu0 0.0
    %1734 = vmatpush1.msra.mxu0 0.0
    %1735 = vmatprep.subr.mxu0 0.0
    %1736 = vmatpush1.msra.mxu0 0.0
    %1737 = vmatprep.subr.mxu0 0.0
    %1738 = vmatpush1.msra.mxu0 0.0
    %1739 = vmatprep.subr.mxu0 0.0
    %1740 = vmatpush1.msra.mxu0 0.0
    %1741 = vmatprep.subr.mxu0 0.0
    %1742 = vmatpush1.msra.mxu0 0.0
    %1743 = vmatprep.subr.mxu0 0.0
    %1744 = vmatpush1.msra.mxu0 0.0
    %1745 = vmatprep.subr.mxu0 0.0
    %1746 = vmatpush1.msra.mxu0 0.0
    %1747 = vmatprep.subr.mxu0 0.0
    %1748 = vmatpush1.msra.mxu0 0.0
    %1749 = vmatprep.subr.mxu0 0.0
    %1750 = vmatpush1.msra.mxu0 0.0
    %1751 = vmatprep.subr.mxu0 0.0
    %1752 = vmatpush1.msra.mxu0 0.0
    %1753 = vmatprep.subr.mxu0 0.0
    %1754 = vmatpush1.msra.mxu0 0.0
    %1755 = vmatprep.subr.mxu0 0.0
    %1756 = vmatpush1.msra.mxu0 0.0
    %1757 = vmatprep.subr.mxu0 0.0
    %1758 = vmatpush1.msra.mxu0 0.0
    %1759 = vmatprep.subr.mxu0 0.0
    %1760 = vmatpush1.msra.mxu0 0.0
    %1761 = vmatprep.subr.mxu0 0.0
    %1762 = vmatpush1.msra.mxu0 0.0
    %1763 = vmatprep.subr.mxu0 0.0
    %1764 = vmatpush1.msra.mxu0 0.0
    %1765 = vmatprep.subr.mxu0 0.0
    %1766 = vmatpush1.msra.mxu0 0.0
    %1767 = vmatprep.subr.mxu0 0.0
    %1768 = vmatpush1.msra.mxu0 0.0
    %1769 = vmatprep.subr.mxu0 0.0
    %1770 = vmatpush1.msra.mxu0 0.0
    %1771 = vmatprep.subr.mxu0 0.0
    %1772 = vmatpush1.msra.mxu0 0.0
    %1773 = vmatprep.subr.mxu0 0.0
    %1774 = vmatpush1.msra.mxu0 0.0
    %1775 = vmatprep.subr.mxu0 0.0
    %1776 = vmatpush1.msra.mxu0 0.0
    %1777 = vmatprep.subr.mxu0 0.0
    %1778 = vmatpush1.msra.mxu0 0.0
    %1779 = vmatprep.subr.mxu0 0.0
    %1780 = vmatpush1.msra.mxu0 0.0
    %1781 = vmatprep.subr.mxu0 0.0
    %1782 = vmatpush1.msra.mxu0 0.0
    %1783 = vmatprep.mubr.f32.mxu0 0.0
    %1784 = vmatmul.mubr.f32.gmra.mrb[0].mxu0 %v1717
    %v1785 = vpop.f32.mrb[0].mxu0
    %v1786 = vadd.f32 0.0, %v1785
    %v1787 = vpop.f32.mrb[0].mxu0
    %1788 = vdwg.mxu0
    %v1789 = vadd.s32 %v1635, 2
    %vm1790 = vcmp.eq.s32.totalorder %v424, %v1789
    %v1791 = vsel %vm1790, 1, 0
    %v1792 = vcvt.s32.f32 %v1791
    %v1794 = vsel %vm792, %v1792, 0
    %1796 = vmatprep.subr.mxu0 0.0
    %1797 = vmatpush1.msra.mxu0 %v1633
    %1798 = vmatprep.subr.mxu0 0.0
    %1799 = vmatpush1.msra.mxu0 %v1634
    %1800 = vmatprep.subr.mxu0 0.0
    %1801 = vmatpush1.msra.mxu0 0.0
    %1802 = vmatprep.subr.mxu0 0.0
    %1803 = vmatpush1.msra.mxu0 0.0
    %1804 = vmatprep.subr.mxu0 0.0
    %1805 = vmatpush1.msra.mxu0 0.0
    %1806 = vmatprep.subr.mxu0 0.0
    %1807 = vmatpush1.msra.mxu0 0.0
    %1808 = vmatprep.subr.mxu0 0.0
    %1809 = vmatpush1.msra.mxu0 0.0
    %1810 = vmatprep.subr.mxu0 0.0
    %1811 = vmatpush1.msra.mxu0 0.0
    %1812 = vmatprep.subr.mxu0 0.0
    %1813 = vmatpush1.msra.mxu0 0.0
    %1814 = vmatprep.subr.mxu0 0.0
    %1815 = vmatpush1.msra.mxu0 0.0
    %1816 = vmatprep.subr.mxu0 0.0
    %1817 = vmatpush1.msra.mxu0 0.0
    %1818 = vmatprep.subr.mxu0 0.0
    %1819 = vmatpush1.msra.mxu0 0.0
    %1820 = vmatprep.subr.mxu0 0.0
    %1821 = vmatpush1.msra.mxu0 0.0
    %1822 = vmatprep.subr.mxu0 0.0
    %1823 = vmatpush1.msra.mxu0 0.0
    %1824 = vmatprep.subr.mxu0 0.0
    %1825 = vmatpush1.msra.mxu0 0.0
    %1826 = vmatprep.subr.mxu0 0.0
    %1827 = vmatpush1.msra.mxu0 0.0
    %1828 = vmatprep.subr.mxu0 0.0
    %1829 = vmatpush1.msra.mxu0 0.0
    %1830 = vmatprep.subr.mxu0 0.0
    %1831 = vmatpush1.msra.mxu0 0.0
    %1832 = vmatprep.subr.mxu0 0.0
    %1833 = vmatpush1.msra.mxu0 0.0
    %1834 = vmatprep.subr.mxu0 0.0
    %1835 = vmatpush1.msra.mxu0 0.0
    %1836 = vmatprep.subr.mxu0 0.0
    %1837 = vmatpush1.msra.mxu0 0.0
    %1838 = vmatprep.subr.mxu0 0.0
    %1839 = vmatpush1.msra.mxu0 0.0
    %1840 = vmatprep.subr.mxu0 0.0
    %1841 = vmatpush1.msra.mxu0 0.0
    %1842 = vmatprep.subr.mxu0 0.0
    %1843 = vmatpush1.msra.mxu0 0.0
    %1844 = vmatprep.subr.mxu0 0.0
    %1845 = vmatpush1.msra.mxu0 0.0
    %1846 = vmatprep.subr.mxu0 0.0
    %1847 = vmatpush1.msra.mxu0 0.0
    %1848 = vmatprep.subr.mxu0 0.0
    %1849 = vmatpush1.msra.mxu0 0.0
    %1850 = vmatprep.subr.mxu0 0.0
    %1851 = vmatpush1.msra.mxu0 0.0
    %1852 = vmatprep.subr.mxu0 0.0
    %1853 = vmatpush1.msra.mxu0 0.0
    %1854 = vmatprep.subr.mxu0 0.0
    %1855 = vmatpush1.msra.mxu0 0.0
    %1856 = vmatprep.subr.mxu0 0.0
    %1857 = vmatpush1.msra.mxu0 0.0
    %1858 = vmatprep.subr.mxu0 0.0
    %1859 = vmatpush1.msra.mxu0 0.0
    %1860 = vmatprep.mubr.f32.mxu0 0.0
    %1861 = vmatmul.mubr.f32.gmra.mrb[0].mxu0 %v1794
    %v1862 = vpop.f32.mrb[0].mxu0
    %v1863 = vadd.f32 0.0, %v1862
    %v1864 = vpop.f32.mrb[0].mxu0
    %1865 = vdwg.mxu0
    %v1866 = vadd.s32 %v1635, 3
    %vm1867 = vcmp.eq.s32.totalorder %v424, %v1866
    %v1868 = vsel %vm1867, 1, 0
    %v1869 = vcvt.s32.f32 %v1868
    %v1871 = vsel %vm792, %v1869, 0
    %1873 = vmatprep.subr.mxu0 0.0
    %1874 = vmatpush1.msra.mxu0 %v1633
    %1875 = vmatprep.subr.mxu0 0.0
    %1876 = vmatpush1.msra.mxu0 %v1634
    %1877 = vmatprep.subr.mxu0 0.0
    %1878 = vmatpush1.msra.mxu0 0.0
    %1879 = vmatprep.subr.mxu0 0.0
    %1880 = vmatpush1.msra.mxu0 0.0
    %1881 = vmatprep.subr.mxu0 0.0
    %1882 = vmatpush1.msra.mxu0 0.0
    %1883 = vmatprep.subr.mxu0 0.0
    %1884 = vmatpush1.msra.mxu0 0.0
    %1885 = vmatprep.subr.mxu0 0.0
    %1886 = vmatpush1.msra.mxu0 0.0
    %1887 = vmatprep.subr.mxu0 0.0
    %1888 = vmatpush1.msra.mxu0 0.0
    %1889 = vmatprep.subr.mxu0 0.0
    %1890 = vmatpush1.msra.mxu0 0.0
    %1891 = vmatprep.subr.mxu0 0.0
    %1892 = vmatpush1.msra.mxu0 0.0
    %1893 = vmatprep.subr.mxu0 0.0
    %1894 = vmatpush1.msra.mxu0 0.0
    %1895 = vmatprep.subr.mxu0 0.0
    %1896 = vmatpush1.msra.mxu0 0.0
    %1897 = vmatprep.subr.mxu0 0.0
    %1898 = vmatpush1.msra.mxu0 0.0
    %1899 = vmatprep.subr.mxu0 0.0
    %1900 = vmatpush1.msra.mxu0 0.0
    %1901 = vmatprep.subr.mxu0 0.0
    %1902 = vmatpush1.msra.mxu0 0.0
    %1903 = vmatprep.subr.mxu0 0.0
    %1904 = vmatpush1.msra.mxu0 0.0
    %1905 = vmatprep.subr.mxu0 0.0
    %1906 = vmatpush1.msra.mxu0 0.0
    %1907 = vmatprep.subr.mxu0 0.0
    %1908 = vmatpush1.msra.mxu0 0.0
    %1909 = vmatprep.subr.mxu0 0.0
    %1910 = vmatpush1.msra.mxu0 0.0
    %1911 = vmatprep.subr.mxu0 0.0
    %1912 = vmatpush1.msra.mxu0 0.0
    %1913 = vmatprep.subr.mxu0 0.0
    %1914 = vmatpush1.msra.mxu0 0.0
    %1915 = vmatprep.subr.mxu0 0.0
    %1916 = vmatpush1.msra.mxu0 0.0
    %1917 = vmatprep.subr.mxu0 0.0
    %1918 = vmatpush1.msra.mxu0 0.0
    %1919 = vmatprep.subr.mxu0 0.0
    %1920 = vmatpush1.msra.mxu0 0.0
    %1921 = vmatprep.subr.mxu0 0.0
    %1922 = vmatpush1.msra.mxu0 0.0
    %1923 = vmatprep.subr.mxu0 0.0
    %1924 = vmatpush1.msra.mxu0 0.0
    %1925 = vmatprep.subr.mxu0 0.0
    %1926 = vmatpush1.msra.mxu0 0.0
    %1927 = vmatprep.subr.mxu0 0.0
    %1928 = vmatpush1.msra.mxu0 0.0
    %1929 = vmatprep.subr.mxu0 0.0
    %1930 = vmatpush1.msra.mxu0 0.0
    %1931 = vmatprep.subr.mxu0 0.0
    %1932 = vmatpush1.msra.mxu0 0.0
    %1933 = vmatprep.subr.mxu0 0.0
    %1934 = vmatpush1.msra.mxu0 0.0
    %1935 = vmatprep.subr.mxu0 0.0
    %1936 = vmatpush1.msra.mxu0 0.0
    %1937 = vmatprep.mubr.f32.mxu0 0.0
    %1938 = vmatmul.mubr.f32.gmra.mrb[0].mxu0 %v1871
    %v1939 = vpop.f32.mrb[0].mxu0
    %v1940 = vadd.f32 0.0, %v1939
    %v1941 = vpop.f32.mrb[0].mxu0
    %1942 = vdwg.mxu0
    %1944 = vrot.lane.b32.xlu0 %v1786, 64
    %v1945 = vpop.permute.xlu0 %1944
    %1948 = vrot.lane.b32.xlu0 %v1940, 64
    %v1949 = vpop.permute.xlu0 %1948
    %v1951 = vsel %vm457, %v1709, %v1945
    %v1952 = vsel %vm457, %v1863, %v1949
    %v1953 = vld [vmem:[%s1 + $0x3f0] sm:$0xff]
    %v1954 = vld [vmem:[%s1 + $0x400] sm:$0xff]
    %v1955 = vld [vmem:[%s1 + $0x410] sm:$0xff]
    %v1956 = vld [vmem:[%s1 + $0x420] sm:$0xff]
    %v1957 = vld [vmem:[%s1 + $0x430] sm:$0xff]
    %v1958 = vld [vmem:[%s1 + $0x440] sm:$0xff]
    %v1959 = vld [vmem:[%s1 + $0x450] sm:$0xff]
    %v1960 = vld [vmem:[%s1 + $0x460] sm:$0xff]
    %v1961 = vld [vmem:[%s1 + $0x470] sm:$0xff]
    %v1962 = vld [vmem:[%s1 + $0x480] sm:$0xff]
    %v1963 = vld [vmem:[%s1 + $0x490] sm:$0xff]
    %v1964 = vld [vmem:[%s1 + $0x4a0] sm:$0xff]
    %v1965 = vld [vmem:[%s1 + $0x4b0] sm:$0xff]
    %v1966 = vld [vmem:[%s1 + $0x4c0] sm:$0xff]
    %v1967 = vld [vmem:[%s1 + $0x4d0] sm:$0xff]
    %v1968 = vld [vmem:[%s1 + $0x4e0] sm:$0xff]
    %v1969 = vld [vmem:[%s1 + $0x4f0] sm:$0xff]
    %v1970 = vld [vmem:[%s1 + $0x500] sm:$0xff]
    %v1971 = vld [vmem:[%s1 + $0x510] sm:$0xff]
    %v1972 = vld [vmem:[%s1 + $0x520] sm:$0xff]
    %v1973 = vld [vmem:[%s1 + $0x530] sm:$0xff]
    %v1974 = vld [vmem:[%s1 + $0x540] sm:$0xff]
    %v1975 = vld [vmem:[%s1 + $0x550] sm:$0xff]
    %v1976 = vld [vmem:[%s1 + $0x560] sm:$0xff]
    %v1977 = vld [vmem:[%s1 + $0x570] sm:$0xff]
    %v1978 = vld [vmem:[%s1 + $0x580] sm:$0xff]
    %v1979 = vld [vmem:[%s1 + $0x590] sm:$0xff]
    %v1980 = vld [vmem:[%s1 + $0x5a0] sm:$0xff]
    %v1981 = vld [vmem:[%s1 + $0x5b0] sm:$0xff]
    %v1982 = vld [vmem:[%s1 + $0x5c0] sm:$0xff]
    %v1983 = vld [vmem:[%s1 + $0x5d0] sm:$0xff]
    %v1984 = vld [vmem:[%s1 + $0x5e0] sm:$0xff]
    %v1985 = vld [vmem:[%s1 + $0x6e2] ss:$0 sm:$0xff]
    %1986 = vmatprep.subr.mxu0 0.0
    %1987 = vmatpush1.msra.mxu0 %v1953
    %1988 = vmatprep.subr.mxu0 0.0
    %1989 = vmatpush1.msra.mxu0 %v1954
    %1990 = vmatprep.subr.mxu0 0.0
    %1991 = vmatpush1.msra.mxu0 %v1955
    %1992 = vmatprep.subr.mxu0 0.0
    %1993 = vmatpush1.msra.mxu0 %v1956
    %1994 = vmatprep.subr.mxu0 0.0
    %1995 = vmatpush1.msra.mxu0 %v1957
    %1996 = vmatprep.subr.mxu0 0.0
    %1997 = vmatpush1.msra.mxu0 %v1958
    %1998 = vmatprep.subr.mxu0 0.0
    %1999 = vmatpush1.msra.mxu0 %v1959
    %2000 = vmatprep.subr.mxu0 0.0
    %2001 = vmatpush1.msra.mxu0 %v1960
    %2002 = vmatprep.subr.mxu0 0.0
    %2003 = vmatpush1.msra.mxu0 %v1961
    %2004 = vmatprep.subr.mxu0 0.0
    %2005 = vmatpush1.msra.mxu0 %v1962
    %2006 = vmatprep.subr.mxu0 0.0
    %2007 = vmatpush1.msra.mxu0 %v1963
    %2008 = vmatprep.subr.mxu0 0.0
    %2009 = vmatpush1.msra.mxu0 %v1964
    %2010 = vmatprep.subr.mxu0 0.0
    %2011 = vmatpush1.msra.mxu0 %v1965
    %2012 = vmatprep.subr.mxu0 0.0
    %2013 = vmatpush1.msra.mxu0 %v1966
    %2014 = vmatprep.subr.mxu0 0.0
    %2015 = vmatpush1.msra.mxu0 %v1967
    %2016 = vmatprep.subr.mxu0 0.0
    %2017 = vmatpush1.msra.mxu0 %v1968
    %2018 = vmatprep.subr.mxu0 0.0
    %2019 = vmatpush1.msra.mxu0 %v1969
    %2020 = vmatprep.subr.mxu0 0.0
    %2021 = vmatpush1.msra.mxu0 %v1970
    %2022 = vmatprep.subr.mxu0 0.0
    %2023 = vmatpush1.msra.mxu0 %v1971
    %2024 = vmatprep.subr.mxu0 0.0
    %2025 = vmatpush1.msra.mxu0 %v1972
    %2026 = vmatprep.subr.mxu0 0.0
    %2027 = vmatpush1.msra.mxu0 %v1973
    %2028 = vmatprep.subr.mxu0 0.0
    %2029 = vmatpush1.msra.mxu0 %v1974
    %2030 = vmatprep.subr.mxu0 0.0
    %2031 = vmatpush1.msra.mxu0 %v1975
    %2032 = vmatprep.subr.mxu0 0.0
    %2033 = vmatpush1.msra.mxu0 %v1976
    %2034 = vmatprep.subr.mxu0 0.0
    %2035 = vmatpush1.msra.mxu0 %v1977
    %2036 = vmatprep.subr.mxu0 0.0
    %2037 = vmatpush1.msra.mxu0 %v1978
    %2038 = vmatprep.subr.mxu0 0.0
    %2039 = vmatpush1.msra.mxu0 %v1979
    %2040 = vmatprep.subr.mxu0 0.0
    %2041 = vmatpush1.msra.mxu0 %v1980
    %2042 = vmatprep.subr.mxu0 0.0
    %2043 = vmatpush1.msra.mxu0 %v1981
    %2044 = vmatprep.subr.mxu0 0.0
    %2045 = vmatpush1.msra.mxu0 %v1982
    %2046 = vmatprep.subr.mxu0 0.0
    %2047 = vmatpush1.msra.mxu0 %v1983
    %2048 = vmatprep.subr.mxu0 0.0
    %2049 = vmatpush1.msra.mxu0 %v1984
    %2050 = vmatprep.mubr.f32.mxu0 %v1952
    %2051 = vmatmul.mubr.f32.gmra.mrb[0].mxu0 %v1951
    %v2052 = vpop.f32.mrb[0].mxu0
    %v2053 = vadd.f32 %v1985, %v2052
    %v2054 = vpop.f32.mrb[0].mxu0
    %2055 = vdwg.mxu0
    %v2056 = vmax.f32 %v2053, 0.0
    %v2057 = vld [vmem:[%s1 + $0x5f0] sm:$0xff]
    %v2058 = vld [vmem:[%s1 + $0x600] sm:$0xff]
    %v2059 = vld [vmem:[%s1 + $0x610] sm:$0xff]
    %v2060 = vld [vmem:[%s1 + $0x620] sm:$0xff]
    %v2061 = vld [vmem:[%s1 + $0x630] sm:$0xff]
    %v2062 = vld [vmem:[%s1 + $0x640] sm:$0xff]
    %v2063 = vld [vmem:[%s1 + $0x650] sm:$0xff]
    %v2064 = vld [vmem:[%s1 + $0x660] sm:$0xff]
    %v2065 = vld [vmem:[%s1 + $0x670] sm:$0xff]
    %v2066 = vld [vmem:[%s1 + $0x680] sm:$0xff]
    %v2067 = vld [vmem:[%s1 + $0x690] sm:$0xff]
    %v2068 = vld [vmem:[%s1 + $0x6a0] sm:$0xff]
    %v2069 = vld [vmem:[%s1 + $0x6b0] sm:$0xff]
    %v2070 = vld [vmem:[%s1 + $0x6c0] sm:$0xff]
    %v2071 = vld [vmem:[%s1 + $0x6d0] sm:$0xff]
    %v2072 = vld [vmem:[%s1 + $0x6e3] ss:$0 sm:$0xff]
    %vm2073 = vcmask 982016
    %v2075 = vsel %vm2073, %v2056, 0
    %2077 = vmatprep.subr.mxu0 0.0
    %2078 = vmatpush1.msra.mxu0 %v2057
    %2079 = vmatprep.subr.mxu0 0.0
    %2080 = vmatpush1.msra.mxu0 %v2058
    %2081 = vmatprep.subr.mxu0 0.0
    %2082 = vmatpush1.msra.mxu0 %v2059
    %2083 = vmatprep.subr.mxu0 0.0
    %2084 = vmatpush1.msra.mxu0 %v2060
    %2085 = vmatprep.subr.mxu0 0.0
    %2086 = vmatpush1.msra.mxu0 %v2061
    %2087 = vmatprep.subr.mxu0 0.0
    %2088 = vmatpush1.msra.mxu0 %v2062
    %2089 = vmatprep.subr.mxu0 0.0
    %2090 = vmatpush1.msra.mxu0 %v2063
    %2091 = vmatprep.subr.mxu0 0.0
    %2092 = vmatpush1.msra.mxu0 %v2064
    %2093 = vmatprep.subr.mxu0 0.0
    %2094 = vmatpush1.msra.mxu0 %v2065
    %2095 = vmatprep.subr.mxu0 0.0
    %2096 = vmatpush1.msra.mxu0 %v2066
    %2097 = vmatprep.subr.mxu0 0.0
    %2098 = vmatpush1.msra.mxu0 %v2067
    %2099 = vmatprep.subr.mxu0 0.0
    %2100 = vmatpush1.msra.mxu0 %v2068
    %2101 = vmatprep.subr.mxu0 0.0
    %2102 = vmatpush1.msra.mxu0 %v2069
    %2103 = vmatprep.subr.mxu0 0.0
    %2104 = vmatpush1.msra.mxu0 %v2070
    %2105 = vmatprep.subr.mxu0 0.0
    %2106 = vmatpush1.msra.mxu0 %v2071
    %2107 = vmatprep.subr.mxu0 0.0
    %2108 = vmatpush1.msra.mxu0 0.0
    %2109 = vmatprep.subr.mxu0 0.0
    %2110 = vmatpush1.msra.mxu0 0.0
    %2111 = vmatprep.subr.mxu0 0.0
    %2112 = vmatpush1.msra.mxu0 0.0
    %2113 = vmatprep.subr.mxu0 0.0
    %2114 = vmatpush1.msra.mxu0 0.0
    %2115 = vmatprep.subr.mxu0 0.0
    %2116 = vmatpush1.msra.mxu0 0.0
    %2117 = vmatprep.subr.mxu0 0.0
    %2118 = vmatpush1.msra.mxu0 0.0
    %2119 = vmatprep.subr.mxu0 0.0
    %2120 = vmatpush1.msra.mxu0 0.0
    %2121 = vmatprep.subr.mxu0 0.0
    %2122 = vmatpush1.msra.mxu0 0.0
    %2123 = vmatprep.subr.mxu0 0.0
    %2124 = vmatpush1.msra.mxu0 0.0
    %2125 = vmatprep.subr.mxu0 0.0
    %2126 = vmatpush1.msra.mxu0 0.0
    %2127 = vmatprep.subr.mxu0 0.0
    %2128 = vmatpush1.msra.mxu0 0.0
    %2129 = vmatprep.subr.mxu0 0.0
    %2130 = vmatpush1.msra.mxu0 0.0
    %2131 = vmatprep.subr.mxu0 0.0
    %2132 = vmatpush1.msra.mxu0 0.0
    %2133 = vmatprep.subr.mxu0 0.0
    %2134 = vmatpush1.msra.mxu0 0.0
    %2135 = vmatprep.subr.mxu0 0.0
    %2136 = vmatpush1.msra.mxu0 0.0
    %2137 = vmatprep.subr.mxu0 0.0
    %2138 = vmatpush1.msra.mxu0 0.0
    %2139 = vmatprep.subr.mxu0 0.0
    %2140 = vmatpush1.msra.mxu0 0.0
    %2141 = vmatprep.mubr.f32.mxu0 0.0
    %2142 = vmatmul.mubr.f32.gmra.mrb[0].mxu0 %v2075
    %v2143 = vpop.f32.mrb[0].mxu0
    %v2144 = vadd.f32 %v2072, %v2143
    %v2145 = vpop.f32.mrb[0].mxu0
    %2146 = vdwg.mxu0
    %vm2147 = vcmask 74752
    %2148 = vst.msk [vmem:[#allocation2] sm:$0x3] %vm2147, %v2144
    // Predicated region
    $region10: #{tpu_custom_call.1} parent=1 // pred_check
      _
    $region11: #{tpu_custom_call.1} parent=1 // pred_check_branch
      %2150 = sbr.rel (0) target = $region13
    $region12: #{tpu_custom_call.1} parent=1 // pred_region
      %s2152 = ssub.s32 32, 32
      %2153 = vsyncadd [#allocation3], %s2152
      %s2155 = sshll.u32 [#allocation2], 4
      %s2156 = int_to_ptr.vmem [resolvable:$true] %s2155
      %2158 = dma.vmem_to_hbm [thread:$0]  %s2156, 32, %s2, [#allocation3]
    $region13: #{tpu_custom_call.1} parent=1 // pred_fallthru
      _
    // Predicated region
    $region14: #{tpu_custom_call.1} parent=1 // pred_check
      _
    $region15: #{tpu_custom_call.1} parent=1 // pred_check_branch
      %2160 = sbr.rel (0) target = $region17
    $region16: #{tpu_custom_call.1} parent=1 // pred_region
      %2161 = dma.done [#allocation3], 32
    $region17: #{tpu_custom_call.1} parent=1 // pred_fallthru
      _
    %2162 = vsyncpa [#allocation3], 1

</llo_original>
